<compile_context>
chip_gen: v7x
topology: tpu7x:2x2x1
jax: 0.10.0
libtpu: 0.0.40
codegen_flags: <defaults>
</compile_context>

<pallas_src>
import functools

import jax
import jax.numpy as jnp
from jax.experimental import pallas as pl
from jax.experimental.pallas import tpu as pltpu


LANE = 128


def _round_up(v, m):
    return (v + m - 1) // m * m


def _layer_seed(layer):
    """Per-layer int32 mixing constant (computed at trace time in Python)."""
    mixed = ((1234 + layer) * 0x9E3779B1) & 0xFFFFFFFF
    if mixed >= 0x80000000:
        mixed -= 0x100000000
    return mixed


# ----------------------------------------------------------------------------
# Fused Pallas kernel: all SAGE layers + final linear in one call
# ----------------------------------------------------------------------------
def make_fused_kernel(num_layers):
    def kernel(*refs):
        adj_ref = refs[0]                              # bf16 [Np, Np] edge COUNTS
        invdeg_ref = refs[1]                           # f32  [Np, 1]  1 / max(deg,1)
        x_ref = refs[2]                                # bf16 [Np, Cin_pad]
        conv_refs = refs[3:3 + 2 * num_layers]         # (W_lr, b) per layer
        wlin_ref = refs[3 + 2 * num_layers]            # bf16 [H_pad, O_pad]
        blin_ref = refs[4 + 2 * num_layers]            # f32  [1, O_pad]
        o_ref = refs[5 + 2 * num_layers]               # f32  [Np, O_pad]

        h = x_ref[...]                                 # bf16 first-layer input
        inv_deg = invdeg_ref[...]                      # f32, tiny, hoisted

        # Hoisted dropout counter: every conv layer has the same output width, so
        # the iotas (not CSE'd by JAX) are emitted exactly once.
        n_rows = x_ref.shape[0]
        hid = conv_refs[0].shape[1] // 2
        rows = jax.lax.broadcasted_iota(jnp.int32, (n_rows, hid), 0)
        cols = jax.lax.broadcasted_iota(jnp.int32, (n_rows, hid), 1)
        counter = rows * jnp.int32(hid) + cols

        for layer in range(num_layers):
            wlr = conv_refs[2 * layer][...]            # bf16 [Cin_pad, 2*H_pad]
            b = conv_refs[2 * layer + 1][...]          # f32  [1, H_pad]
            cop = wlr.shape[1] // 2

            h_bf = h.astype(jnp.bfloat16)              # no-op for layer 0 (already bf16)
            # One wide MXU matmul for both the aggregation projection and the
            # root transform; reassociated mean agg: diag(1/deg) @ A @ (h @ W_l).
            both = jnp.dot(h_bf, wlr, preferred_element_type=jnp.float32)
            proj = both[:, :cop]
            root = both[:, cop:]

            agg = jnp.dot(adj_ref[...], proj.astype(jnp.bfloat16),
                          preferred_element_type=jnp.float32)
            h = agg * inv_deg + root + b               # f32 epilogue

            # Fused ReLU + dropout(p=0.5). The 2x keep-scale is folded into the
            # next layer's / final linear's weights, so this is a single select.
            r = ((counter ^ jnp.int32(_layer_seed(layer)))
                 * jnp.int32(1664525) + jnp.int32(1013904223))
            keep = r < 0                               # LCG top bit -> p(keep) = 1/2
            h = jnp.where(jnp.logical_and(keep, h > 0.0), h, 0.0)

        o_ref[...] = (jnp.dot(h.astype(jnp.bfloat16), wlin_ref[...],
                              preferred_element_type=jnp.float32)
                      + blin_ref[...])

    return kernel


_VMEM = pl.BlockSpec(memory_space=pltpu.MemorySpace.VMEM)


def graphsage_fused(adj, inv_deg, x, conv_flat, lin_w, lin_b, num_layers):
    n_pad = x.shape[0]
    out_pad = lin_w.shape[1]
    n_inputs = 3 + len(conv_flat) + 2
    return pl.pallas_call(
        make_fused_kernel(num_layers),
        out_shape=jax.ShapeDtypeStruct((n_pad, out_pad), jnp.float32),
        in_specs=[_VMEM] * n_inputs,
        out_specs=_VMEM,
    )(adj, inv_deg, x, *conv_flat, lin_w, lin_b)


# ----------------------------------------------------------------------------
# Glue: edge_index -> dense edge-count adjacency + f32 reciprocal degrees
# ----------------------------------------------------------------------------
def build_adj_counts(edge_index, n_pad):
    src = edge_index[0]
    dst = edge_index[1]
    a = jnp.zeros((n_pad, n_pad), jnp.float32)
    a = a.at[dst, src].add(1.0)                        # message flows src -> dst
    deg = a.sum(axis=1, keepdims=True)
    inv_deg = 1.0 / jnp.maximum(deg, 1.0)              # f32 (exact mean normalization)
    return a.astype(jnp.bfloat16), inv_deg             # small integer counts: exact in bf16


def _pad_to(a, rows, cols):
    return jnp.pad(a, ((0, rows - a.shape[0]), (0, cols - a.shape[1])))


# ----------------------------------------------------------------------------
# Parameter init (deterministic, PyTorch-style uniform(-1/sqrt(fan_in), ...))
# ----------------------------------------------------------------------------
def init_params(key, in_channels, hidden_channels, out_channels, num_layers):
    params = {"convs": [], "lin": None}
    dims = [in_channels] + [hidden_channels] * num_layers
    for layer in range(num_layers):
        c_in, c_out = dims[layer], dims[layer + 1]
        key, k1, k2, k3 = jax.random.split(key, 4)
        bound = 1.0 / jnp.sqrt(jnp.float32(c_in))
        w_l = jax.random.uniform(k1, (c_in, c_out), jnp.float32, -bound, bound)
        w_r = jax.random.uniform(k2, (c_in, c_out), jnp.float32, -bound, bound)
        b = jax.random.uniform(k3, (1, c_out), jnp.float32, -bound, bound)
        params["convs"].append((w_l, w_r, b))
    key, k1, k2 = jax.random.split(key, 3)
    bound = 1.0 / jnp.sqrt(jnp.float32(hidden_channels))
    w = jax.random.uniform(k1, (hidden_channels, out_channels),
                           jnp.float32, -bound, bound)
    b = jax.random.uniform(k2, (1, out_channels), jnp.float32, -bound, bound)
    params["lin"] = (w, b)
    return params


# ----------------------------------------------------------------------------
# Full GraphSAGE forward (lane-dense padding + one fused pallas_call)
# ----------------------------------------------------------------------------
@functools.partial(jax.jit, static_argnames=("num_nodes",))
def graph_sage_forward(params, x, edge_index, num_nodes):
    num_layers = len(params["convs"])
    n_pad = max(_round_up(num_nodes, LANE), LANE)      # fill MXU M / contraction depth

    adj, inv_deg = build_adj_counts(edge_index, n_pad)

    in_ch = x.shape[1]
    x_p = _pad_to(x, n_pad, _round_up(in_ch, LANE)).astype(jnp.bfloat16)

    conv_flat = []
    for layer, (w_l, w_r, b) in enumerate(params["convs"]):
        c_in, c_out = w_l.shape
        cip, cop = _round_up(c_in, LANE), _round_up(c_out, LANE)
        # Fold the PREVIOUS layer's dropout 1/keep scale (2.0) into this layer's
        # weights (exact: power-of-two scale, commutes with the bf16 cast).
        scale = 2.0 if layer > 0 else 1.0
        w_lr = jnp.concatenate(
            [_pad_to(w_l * scale, cip, cop), _pad_to(w_r * scale, cip, cop)], axis=1)
        conv_flat += [w_lr.astype(jnp.bfloat16), _pad_to(b, 1, cop)]

    w, b = params["lin"]
    h_in, out_ch = w.shape
    hp, op = _round_up(h_in, LANE), _round_up(out_ch, LANE)
    w_p = _pad_to(w * 2.0, hp, op).astype(jnp.bfloat16)   # fold last dropout scale
    b_p = _pad_to(b, 1, op)

    out_pad = graphsage_fused(adj, inv_deg, x_p, conv_flat, w_p, b_p, num_layers)
    return out_pad[:num_nodes, :out_ch]


# ----------------------------------------------------------------------------
if __name__ == "__main__":
    N = 64             # nodes
    E = 256            # edges
    IN_CH = 32
    HIDDEN = 32
    OUT_CH = 16
    NUM_LAYERS = 2

    key = jax.random.PRNGKey(0)
    k_x, k_e, k_p = jax.random.split(key, 3)

    x = jax.random.normal(k_x, (N, IN_CH), jnp.float32)
    edge_index = jax.random.randint(k_e, (2, E), 0, N, dtype=jnp.int32)
    params = init_params(k_p, IN_CH, HIDDEN, OUT_CH, NUM_LAYERS)

    out = graph_sage_forward(params, x, edge_index, N)
    out = jax.block_until_ready(out)

    assert out.shape == (N, OUT_CH), out.shape
    assert out.dtype == jnp.float32, out.dtype
    assert bool(jnp.all(jnp.isfinite(out)))
    print("KERNEL_OK")
</pallas_src>

<mosaic_0001>
module attributes {stable_mosaic.version = 11 : i64} {
  func.func private @main(%arg0: i32) attributes {dimension_semantics = [#tpu.dimension_semantics<core_parallel>], iteration_bounds = array<i64: 2>, tpu.core_type = #tpu.core_type<sc_scalar_subcore>, window_params = []} {
    return
  }
}

module attributes {stable_mosaic.version = 11 : i64} {
  func.func private @main(%arg0: i32) attributes {dimension_semantics = [#tpu.dimension_semantics<core_parallel>], iteration_bounds = array<i64: 2>, tpu.core_type = #tpu.core_type<sc_scalar_subcore>, window_params = []} {
    return
  }
}

module attributes {stable_mosaic.version = 11 : i64} {
  func.func @kernel(%arg0: memref<128x128xbf16, #tpu.memory_space<vmem>>, %arg1: memref<128x1xf32, #tpu.memory_space<vmem>>, %arg2: memref<128x128xbf16, #tpu.memory_space<vmem>>, %arg3: memref<128x256xbf16, #tpu.memory_space<vmem>>, %arg4: memref<1x128xf32, #tpu.memory_space<vmem>>, %arg5: memref<128x256xbf16, #tpu.memory_space<vmem>>, %arg6: memref<1x128xf32, #tpu.memory_space<vmem>>, %arg7: memref<128x128xbf16, #tpu.memory_space<vmem>>, %arg8: memref<1x128xf32, #tpu.memory_space<vmem>>, %arg9: memref<128x128xf32, #tpu.memory_space<vmem>>) attributes {dimension_semantics = [], scalar_prefetch = 0 : i64, scratch_operands = 0 : i64, tpu.core_type = #tpu.core_type<tc>} {
    %c0 = arith.constant 0 : index
    %c0_0 = arith.constant 0 : index
    %0 = vector.load %arg2[%c0, %c0_0] : memref<128x128xbf16, #tpu.memory_space<vmem>>, vector<128x128xbf16>
    %c0_1 = arith.constant 0 : index
    %c0_2 = arith.constant 0 : index
    %1 = vector.load %arg1[%c0_1, %c0_2] : memref<128x1xf32, #tpu.memory_space<vmem>>, vector<128x1xf32>
    %2 = tpu.iota {dimensions = array<i32: 0>} : vector<128x128xi32>
    %3 = tpu.iota {dimensions = array<i32: 1>} : vector<128x128xi32>
    %c128_i32 = arith.constant 128 : i32
    %4 = vector.broadcast %c128_i32 : i32 to vector<128x128xi32>
    %5 = arith.muli %2, %4 : vector<128x128xi32>
    %6 = arith.addi %5, %3 : vector<128x128xi32>
    %c0_3 = arith.constant 0 : index
    %c0_4 = arith.constant 0 : index
    %7 = vector.load %arg3[%c0_3, %c0_4] : memref<128x256xbf16, #tpu.memory_space<vmem>>, vector<128x256xbf16>
    %c0_5 = arith.constant 0 : index
    %c0_6 = arith.constant 0 : index
    %8 = vector.load %arg4[%c0_5, %c0_6] : memref<1x128xf32, #tpu.memory_space<vmem>>, vector<1x128xf32>
    %cst = arith.constant dense<0.000000e+00> : vector<128x256xf32>
    %9 = tpu.matmul %0, %7, %cst {dimension_numbers = #tpu.dot_dimension_numbers<[1], [0], [0], [1], [0, 0, 1, 1], [], []>} : vector<128x128xbf16>, vector<128x256xbf16>, vector<128x256xf32> -> vector<128x256xf32>
    %10 = vector.extract_strided_slice %9 {offsets = [0, 0], sizes = [128, 128], strides = [1, 1]} : vector<128x256xf32> to vector<128x128xf32>
    %11 = vector.extract_strided_slice %9 {offsets = [0, 128], sizes = [128, 128], strides = [1, 1]} : vector<128x256xf32> to vector<128x128xf32>
    %c0_7 = arith.constant 0 : index
    %c0_8 = arith.constant 0 : index
    %12 = vector.load %arg0[%c0_7, %c0_8] : memref<128x128xbf16, #tpu.memory_space<vmem>>, vector<128x128xbf16>
    %13 = arith.truncf %10 : vector<128x128xf32> to vector<128x128xbf16>
    %cst_9 = arith.constant dense<0.000000e+00> : vector<128x128xf32>
    %14 = tpu.matmul %12, %13, %cst_9 {dimension_numbers = #tpu.dot_dimension_numbers<[1], [0], [0], [1], [0, 0, 1, 1], [], []>} : vector<128x128xbf16>, vector<128x128xbf16>, vector<128x128xf32> -> vector<128x128xf32>
    %15 = vector.broadcast %1 : vector<128x1xf32> to vector<128x128xf32>
    %16 = arith.mulf %14, %15 : vector<128x128xf32>
    %17 = arith.addf %16, %11 : vector<128x128xf32>
    %18 = vector.broadcast %8 : vector<1x128xf32> to vector<128x128xf32>
    %19 = arith.addf %17, %18 : vector<128x128xf32>
    %c-1486317774_i32 = arith.constant -1486317774 : i32
    %20 = vector.broadcast %c-1486317774_i32 : i32 to vector<128x128xi32>
    %21 = arith.xori %6, %20 : vector<128x128xi32>
    %c1664525_i32 = arith.constant 1664525 : i32
    %22 = vector.broadcast %c1664525_i32 : i32 to vector<128x128xi32>
    %23 = arith.muli %21, %22 : vector<128x128xi32>
    %c1013904223_i32 = arith.constant 1013904223 : i32
    %24 = vector.broadcast %c1013904223_i32 : i32 to vector<128x128xi32>
    %25 = arith.addi %23, %24 : vector<128x128xi32>
    %c0_i32 = arith.constant 0 : i32
    %26 = vector.broadcast %c0_i32 : i32 to vector<128x128xi32>
    %27 = arith.cmpi slt, %25, %26 : vector<128x128xi32>
    %cst_10 = arith.constant 0.000000e+00 : f32
    %28 = vector.broadcast %cst_10 : f32 to vector<128x128xf32>
    %29 = arith.cmpf ogt, %19, %28 : vector<128x128xf32>
    %30 = arith.andi %27, %29 : vector<128x128xi1>
    %cst_11 = arith.constant 0.000000e+00 : f32
    %31 = vector.broadcast %cst_11 : f32 to vector<128x128xf32>
    %32 = arith.select %30, %19, %31 : vector<128x128xi1>, vector<128x128xf32>
    %c0_12 = arith.constant 0 : index
    %c0_13 = arith.constant 0 : index
    %33 = vector.load %arg5[%c0_12, %c0_13] : memref<128x256xbf16, #tpu.memory_space<vmem>>, vector<128x256xbf16>
    %c0_14 = arith.constant 0 : index
    %c0_15 = arith.constant 0 : index
    %34 = vector.load %arg6[%c0_14, %c0_15] : memref<1x128xf32, #tpu.memory_space<vmem>>, vector<1x128xf32>
    %35 = arith.truncf %32 : vector<128x128xf32> to vector<128x128xbf16>
    %cst_16 = arith.constant dense<0.000000e+00> : vector<128x256xf32>
    %36 = tpu.matmul %35, %33, %cst_16 {dimension_numbers = #tpu.dot_dimension_numbers<[1], [0], [0], [1], [0, 0, 1, 1], [], []>} : vector<128x128xbf16>, vector<128x256xbf16>, vector<128x256xf32> -> vector<128x256xf32>
    %37 = vector.extract_strided_slice %36 {offsets = [0, 0], sizes = [128, 128], strides = [1, 1]} : vector<128x256xf32> to vector<128x128xf32>
    %38 = vector.extract_strided_slice %36 {offsets = [0, 128], sizes = [128, 128], strides = [1, 1]} : vector<128x256xf32> to vector<128x128xf32>
    %c0_17 = arith.constant 0 : index
    %c0_18 = arith.constant 0 : index
    %39 = vector.load %arg0[%c0_17, %c0_18] : memref<128x128xbf16, #tpu.memory_space<vmem>>, vector<128x128xbf16>
    %40 = arith.truncf %37 : vector<128x128xf32> to vector<128x128xbf16>
    %cst_19 = arith.constant dense<0.000000e+00> : vector<128x128xf32>
    %41 = tpu.matmul %39, %40, %cst_19 {dimension_numbers = #tpu.dot_dimension_numbers<[1], [0], [0], [1], [0, 0, 1, 1], [], []>} : vector<128x128xbf16>, vector<128x128xbf16>, vector<128x128xf32> -> vector<128x128xf32>
    %42 = vector.broadcast %1 : vector<128x1xf32> to vector<128x128xf32>
    %43 = arith.mulf %41, %42 : vector<128x128xf32>
    %44 = arith.addf %43, %38 : vector<128x128xf32>
    %45 = vector.broadcast %34 : vector<1x128xf32> to vector<128x128xf32>
    %46 = arith.addf %44, %45 : vector<128x128xf32>
    %c1168117987_i32 = arith.constant 1168117987 : i32
    %47 = vector.broadcast %c1168117987_i32 : i32 to vector<128x128xi32>
    %48 = arith.xori %6, %47 : vector<128x128xi32>
    %c1664525_i32_20 = arith.constant 1664525 : i32
    %49 = vector.broadcast %c1664525_i32_20 : i32 to vector<128x128xi32>
    %50 = arith.muli %48, %49 : vector<128x128xi32>
    %c1013904223_i32_21 = arith.constant 1013904223 : i32
    %51 = vector.broadcast %c1013904223_i32_21 : i32 to vector<128x128xi32>
    %52 = arith.addi %50, %51 : vector<128x128xi32>
    %c0_i32_22 = arith.constant 0 : i32
    %53 = vector.broadcast %c0_i32_22 : i32 to vector<128x128xi32>
    %54 = arith.cmpi slt, %52, %53 : vector<128x128xi32>
    %cst_23 = arith.constant 0.000000e+00 : f32
    %55 = vector.broadcast %cst_23 : f32 to vector<128x128xf32>
    %56 = arith.cmpf ogt, %46, %55 : vector<128x128xf32>
    %57 = arith.andi %54, %56 : vector<128x128xi1>
    %cst_24 = arith.constant 0.000000e+00 : f32
    %58 = vector.broadcast %cst_24 : f32 to vector<128x128xf32>
    %59 = arith.select %57, %46, %58 : vector<128x128xi1>, vector<128x128xf32>
    %60 = arith.truncf %59 : vector<128x128xf32> to vector<128x128xbf16>
    %c0_25 = arith.constant 0 : index
    %c0_26 = arith.constant 0 : index
    %61 = vector.load %arg7[%c0_25, %c0_26] : memref<128x128xbf16, #tpu.memory_space<vmem>>, vector<128x128xbf16>
    %cst_27 = arith.constant dense<0.000000e+00> : vector<128x128xf32>
    %62 = tpu.matmul %60, %61, %cst_27 {dimension_numbers = #tpu.dot_dimension_numbers<[1], [0], [0], [1], [0, 0, 1, 1], [], []>} : vector<128x128xbf16>, vector<128x128xbf16>, vector<128x128xf32> -> vector<128x128xf32>
    %c0_28 = arith.constant 0 : index
    %c0_29 = arith.constant 0 : index
    %63 = vector.load %arg8[%c0_28, %c0_29] : memref<1x128xf32, #tpu.memory_space<vmem>>, vector<1x128xf32>
    %64 = vector.broadcast %63 : vector<1x128xf32> to vector<128x128xf32>
    %65 = arith.addf %62, %64 : vector<128x128xf32>
    %c0_30 = arith.constant 0 : index
    %c0_31 = arith.constant 0 : index
    %66 = vector.load %arg9[%c0_30, %c0_31] : memref<128x128xf32, #tpu.memory_space<vmem>>, vector<128x128xf32>
    tpu.vector_store %arg9[%c0_30, %c0_31], %65 {strides = array<i32>} : memref<128x128xf32, #tpu.memory_space<vmem>>, vector<128x128xf32>,
    return
  }
}

</mosaic_0001>

<llo_original>
// kernel: graph_sage_forward.1
$region0: #{graph_sage_forward.1}
  #allocation0 [shape = 'u32[]', space=smem, size = 0x4, offset = 0x4, fixed_abs, tag = 'smem constant byte address 0x4 - core index']
  #allocation1 [shape = 'u32[144,128]{1,0:T(1,128)}', space=vmem, size = 0x12000, scoped, tag = 'internal scratch']
  %s0 = inlined_call_operand.vmem [shape: bf16[128,128], index: 0, kind: input, shape index: {}]
  %s1 = inlined_call_operand.vmem [shape: f32[128,1], index: 1, kind: input, shape index: {}]
  %s2 = inlined_call_operand.vmem [shape: bf16[128,128], index: 2, kind: input, shape index: {}]
  %s3 = inlined_call_operand.vmem [shape: bf16[128,256], index: 3, kind: input, shape index: {}]
  %s4 = inlined_call_operand.vmem [shape: f32[1,128], index: 4, kind: input, shape index: {}]
  %s5 = inlined_call_operand.vmem [shape: bf16[128,256], index: 5, kind: input, shape index: {}]
  %s6 = inlined_call_operand.vmem [shape: f32[1,128], index: 6, kind: input, shape index: {}]
  %s7 = inlined_call_operand.vmem [shape: bf16[128,128], index: 7, kind: input, shape index: {}]
  %s8 = inlined_call_operand.vmem [shape: f32[1,128], index: 8, kind: input, shape index: {}]
  %s9 = inlined_call_operand.vmem [shape: f32[128,128], index: 9, kind: output, shape index: {}]
  %s10 = sld [smem:[#allocation0]]
  $region46: #{graph_sage_forward.1} parent=0
    _
  %s12 = ssub.s32 1, %s10
  %s13 = scalar_select 0, %s12, %s10
  // Predicated region
  $region2: #{graph_sage_forward.1} parent=0 // pred_check
    _
  $region3: #{graph_sage_forward.1} parent=0 // pred_check_branch
    %15 = sbr.rel (0) target = $region5
  $region4: #{graph_sage_forward.1} parent=0 // pred_region
    _
  $region5: #{graph_sage_forward.1} parent=0 // pred_fallthru
    _
  // Predicated region
  $region6: #{graph_sage_forward.1} parent=0 // pred_check
    _
  $region7: #{graph_sage_forward.1} parent=0 // pred_check_branch
    %17 = sbr.rel (0) target = $region9
  $region8: #{graph_sage_forward.1} parent=0 // pred_region
    _
  $region9: #{graph_sage_forward.1} parent=0 // pred_fallthru
    _
  // Predicated region
  $region10: #{graph_sage_forward.1} parent=0 // pred_check
    _
  $region11: #{graph_sage_forward.1} parent=0 // pred_check_branch
    %19 = sbr.rel (0) target = $region13
  $region12: #{graph_sage_forward.1} parent=0 // pred_region
    _
  $region13: #{graph_sage_forward.1} parent=0 // pred_fallthru
    _
  // Predicated region
  $region14: #{graph_sage_forward.1} parent=0 // pred_check
    _
  $region15: #{graph_sage_forward.1} parent=0 // pred_check_branch
    %21 = sbr.rel (0) target = $region17
  $region16: #{graph_sage_forward.1} parent=0 // pred_region
    _
  $region17: #{graph_sage_forward.1} parent=0 // pred_fallthru
    _
  // Predicated region
  $region18: #{graph_sage_forward.1} parent=0 // pred_check
    _
  $region19: #{graph_sage_forward.1} parent=0 // pred_check_branch
    %23 = sbr.rel (0) target = $region21
  $region20: #{graph_sage_forward.1} parent=0 // pred_region
    _
  $region21: #{graph_sage_forward.1} parent=0 // pred_fallthru
    _
  // Predicated region
  $region22: #{graph_sage_forward.1} parent=0 // pred_check
    _
  $region23: #{graph_sage_forward.1} parent=0 // pred_check_branch
    %25 = sbr.rel (0) target = $region25
  $region24: #{graph_sage_forward.1} parent=0 // pred_region
    _
  $region25: #{graph_sage_forward.1} parent=0 // pred_fallthru
    _
  // Predicated region
  $region26: #{graph_sage_forward.1} parent=0 // pred_check
    _
  $region27: #{graph_sage_forward.1} parent=0 // pred_check_branch
    %27 = sbr.rel (0) target = $region29
  $region28: #{graph_sage_forward.1} parent=0 // pred_region
    _
  $region29: #{graph_sage_forward.1} parent=0 // pred_fallthru
    _
  // Predicated region
  $region30: #{graph_sage_forward.1} parent=0 // pred_check
    _
  $region31: #{graph_sage_forward.1} parent=0 // pred_check_branch
    %29 = sbr.rel (0) target = $region33
  $region32: #{graph_sage_forward.1} parent=0 // pred_region
    _
  $region33: #{graph_sage_forward.1} parent=0 // pred_fallthru
    _
  // Predicated region
  $region34: #{graph_sage_forward.1} parent=0 // pred_check
    _
  $region35: #{graph_sage_forward.1} parent=0 // pred_check_branch
    %31 = sbr.rel (0) target = $region37
  $region36: #{graph_sage_forward.1} parent=0 // pred_region
    _
  $region37: #{graph_sage_forward.1} parent=0 // pred_fallthru
    _
  %v33 = vld [vmem:[%s2] sm:$0xf]
  %v34 = vld [vmem:[%s2 + $0x4] sm:$0xf]
  %v35 = vld [vmem:[%s2 + $0x8] sm:$0xf]
  %v36 = vld [vmem:[%s2 + $0xc] sm:$0xf]
  %v37 = vld [vmem:[%s2 + $0x10] sm:$0xf]
  %v38 = vld [vmem:[%s2 + $0x14] sm:$0xf]
  %v39 = vld [vmem:[%s2 + $0x18] sm:$0xf]
  %v40 = vld [vmem:[%s2 + $0x1c] sm:$0xf]
  %v41 = vld [vmem:[%s2 + $0x20] sm:$0xf]
  %v42 = vld [vmem:[%s2 + $0x24] sm:$0xf]
  %v43 = vld [vmem:[%s2 + $0x28] sm:$0xf]
  %v44 = vld [vmem:[%s2 + $0x2c] sm:$0xf]
  %v45 = vld [vmem:[%s2 + $0x30] sm:$0xf]
  %v46 = vld [vmem:[%s2 + $0x34] sm:$0xf]
  %v47 = vld [vmem:[%s2 + $0x38] sm:$0xf]
  %v48 = vld [vmem:[%s2 + $0x3c] sm:$0xf]
  %v49 = vld [vmem:[%s1] sm:$0xff]
  %v50 = vld [vmem:[%s1 + $0x8] sm:$0xff]
  %v51 = vld [vmem:[%s1 + $0x10] sm:$0xff]
  %v52 = vld [vmem:[%s1 + $0x18] sm:$0xff]
  %v53 = vld [vmem:[%s1 + $0x20] sm:$0xff]
  %v54 = vld [vmem:[%s1 + $0x28] sm:$0xff]
  %v55 = vld [vmem:[%s1 + $0x30] sm:$0xff]
  %v56 = vld [vmem:[%s1 + $0x38] sm:$0xff]
  %v57 = vld [vmem:[%s1 + $0x40] sm:$0xff]
  %v58 = vld [vmem:[%s1 + $0x48] sm:$0xff]
  %v59 = vld [vmem:[%s1 + $0x50] sm:$0xff]
  %v60 = vld [vmem:[%s1 + $0x58] sm:$0xff]
  %v61 = vld [vmem:[%s1 + $0x60] sm:$0xff]
  %v62 = vld [vmem:[%s1 + $0x68] sm:$0xff]
  %v63 = vld [vmem:[%s1 + $0x70] sm:$0xff]
  %v64 = vld [vmem:[%s1 + $0x78] sm:$0xff]
  %v65 = vlaneseq
  %v66 = vshrl.u32 %v65, 7
  %v67 = vadd.s32 %v66, 8
  %v68 = vadd.s32 %v66, 16
  %v69 = vadd.s32 %v66, 24
  %v70 = vadd.s32 %v66, 32
  %v71 = vadd.s32 %v66, 40
  %v72 = vadd.s32 %v66, 48
  %v73 = vadd.s32 %v66, 56
  %v74 = vadd.s32 %v66, 64
  %v75 = vadd.s32 %v66, 72
  %v76 = vadd.s32 %v66, 80
  %v77 = vadd.s32 %v66, 88
  %v78 = vadd.s32 %v66, 96
  %v79 = vadd.s32 %v66, 104
  %v80 = vadd.s32 %v66, 112
  %v81 = vadd.s32 %v66, 120
  %v82 = vlaneseq
  %v83 = vand.u32 %v82, 127
  %v84 = vmul.u32 %v66, 128
  %v85 = vmul.u32 %v67, 128
  %v86 = vmul.u32 %v68, 128
  %v87 = vmul.u32 %v69, 128
  %v88 = vmul.u32 %v70, 128
  %v89 = vmul.u32 %v71, 128
  %v90 = vmul.u32 %v72, 128
  %v91 = vmul.u32 %v73, 128
  %v92 = vmul.u32 %v74, 128
  %v93 = vmul.u32 %v75, 128
  %v94 = vmul.u32 %v76, 128
  %v95 = vmul.u32 %v77, 128
  %v96 = vmul.u32 %v78, 128
  %v97 = vmul.u32 %v79, 128
  %v98 = vmul.u32 %v80, 128
  %v99 = vmul.u32 %v81, 128
  %v100 = vadd.s32 %v84, %v83
  %v101 = vadd.s32 %v85, %v83
  %v102 = vadd.s32 %v86, %v83
  %v103 = vadd.s32 %v87, %v83
  %v104 = vadd.s32 %v88, %v83
  %v105 = vadd.s32 %v89, %v83
  %v106 = vadd.s32 %v90, %v83
  %v107 = vadd.s32 %v91, %v83
  %v108 = vadd.s32 %v92, %v83
  %v109 = vadd.s32 %v93, %v83
  %v110 = vadd.s32 %v94, %v83
  %v111 = vadd.s32 %v95, %v83
  %v112 = vadd.s32 %v96, %v83
  %v113 = vadd.s32 %v97, %v83
  %v114 = vadd.s32 %v98, %v83
  %v115 = vadd.s32 %v99, %v83
  %v116 = vld [vmem:[%s3] sm:$0xff]
  %v117 = vld [vmem:[%s3 + $0x8] sm:$0xff]
  %v118 = vld [vmem:[%s3 + $0x10] sm:$0xff]
  %v119 = vld [vmem:[%s3 + $0x18] sm:$0xff]
  %v120 = vld [vmem:[%s3 + $0x20] sm:$0xff]
  %v121 = vld [vmem:[%s3 + $0x28] sm:$0xff]
  %v122 = vld [vmem:[%s3 + $0x30] sm:$0xff]
  %v123 = vld [vmem:[%s3 + $0x38] sm:$0xff]
  %v124 = vld [vmem:[%s3 + $0x40] sm:$0xff]
  %v125 = vld [vmem:[%s3 + $0x48] sm:$0xff]
  %v126 = vld [vmem:[%s3 + $0x50] sm:$0xff]
  %v127 = vld [vmem:[%s3 + $0x58] sm:$0xff]
  %v128 = vld [vmem:[%s3 + $0x60] sm:$0xff]
  %v129 = vld [vmem:[%s3 + $0x68] sm:$0xff]
  %v130 = vld [vmem:[%s3 + $0x70] sm:$0xff]
  %v131 = vld [vmem:[%s3 + $0x78] sm:$0xff]
  %v132 = vld [vmem:[%s4] sm:$0x1]
  %v149 = vunpack.c.l.b16 %v33
  %v150 = vunpack.c.l.b16 %v34
  %v151 = vunpack.c.l.b16 %v35
  %v152 = vunpack.c.l.b16 %v36
  %v153 = vunpack.c.l.b16 %v37
  %v154 = vunpack.c.l.b16 %v38
  %v155 = vunpack.c.l.b16 %v39
  %v156 = vunpack.c.l.b16 %v40
  %v157 = vunpack.c.l.b16 %v41
  %v158 = vunpack.c.l.b16 %v42
  %v159 = vunpack.c.l.b16 %v43
  %v160 = vunpack.c.l.b16 %v44
  %v161 = vunpack.c.l.b16 %v45
  %v162 = vunpack.c.l.b16 %v46
  %v163 = vunpack.c.l.b16 %v47
  %v164 = vunpack.c.l.b16 %v48
  %v165 = vpack.c.b16 %v150, %v149
  %v166 = vpack.c.b16 %v152, %v151
  %v167 = vpack.c.b16 %v154, %v153
  %v168 = vpack.c.b16 %v156, %v155
  %v169 = vpack.c.b16 %v158, %v157
  %v170 = vpack.c.b16 %v160, %v159
  %v171 = vpack.c.b16 %v162, %v161
  %v172 = vpack.c.b16 %v164, %v163
  %v197 = vunpack.c.l.b16 %v116
  %v198 = vunpack.c.h.b16 %v116
  %v199 = vunpack.c.l.b16 %v117
  %v200 = vunpack.c.h.b16 %v117
  %v201 = vunpack.c.l.b16 %v118
  %v202 = vunpack.c.h.b16 %v118
  %v203 = vunpack.c.l.b16 %v119
  %v204 = vunpack.c.h.b16 %v119
  %v205 = vunpack.c.l.b16 %v120
  %v206 = vunpack.c.h.b16 %v120
  %v207 = vunpack.c.l.b16 %v121
  %v208 = vunpack.c.h.b16 %v121
  %v209 = vunpack.c.l.b16 %v122
  %v210 = vunpack.c.h.b16 %v122
  %v211 = vunpack.c.l.b16 %v123
  %v212 = vunpack.c.h.b16 %v123
  %v213 = vunpack.c.l.b16 %v124
  %v214 = vunpack.c.h.b16 %v124
  %v215 = vunpack.c.l.b16 %v125
  %v216 = vunpack.c.h.b16 %v125
  %v217 = vunpack.c.l.b16 %v126
  %v218 = vunpack.c.h.b16 %v126
  %v219 = vunpack.c.l.b16 %v127
  %v220 = vunpack.c.h.b16 %v127
  %v221 = vunpack.c.l.b16 %v128
  %v222 = vunpack.c.h.b16 %v128
  %v223 = vunpack.c.l.b16 %v129
  %v224 = vunpack.c.h.b16 %v129
  %v225 = vunpack.c.l.b16 %v130
  %v226 = vunpack.c.h.b16 %v130
  %v227 = vunpack.c.l.b16 %v131
  %v228 = vunpack.c.h.b16 %v131
  %v229 = vpack.c.b16 %v199, %v197
  %v230 = vpack.c.b16 %v200, %v198
  %v231 = vpack.c.b16 %v203, %v201
  %v232 = vpack.c.b16 %v204, %v202
  %v233 = vpack.c.b16 %v207, %v205
  %v234 = vpack.c.b16 %v208, %v206
  %v235 = vpack.c.b16 %v211, %v209
  %v236 = vpack.c.b16 %v212, %v210
  %v237 = vpack.c.b16 %v215, %v213
  %v238 = vpack.c.b16 %v216, %v214
  %v239 = vpack.c.b16 %v219, %v217
  %v240 = vpack.c.b16 %v220, %v218
  %v241 = vpack.c.b16 %v223, %v221
  %v242 = vpack.c.b16 %v224, %v222
  %v243 = vpack.c.b16 %v227, %v225
  %v244 = vpack.c.b16 %v228, %v226
  %261 = vmatprep.subr.bf16.mxu0 %v230
  %262 = vmatpush1.bf16.msra.mxu0 %v229
  %263 = vmatprep.subr.bf16.mxu0 %v232
  %264 = vmatpush1.bf16.msra.mxu0 %v231
  %265 = vmatprep.subr.bf16.mxu0 %v234
  %266 = vmatpush1.bf16.msra.mxu0 %v233
  %267 = vmatprep.subr.bf16.mxu0 %v236
  %268 = vmatpush1.bf16.msra.mxu0 %v235
  %269 = vmatprep.subr.bf16.mxu0 %v238
  %270 = vmatpush1.bf16.msra.mxu0 %v237
  %271 = vmatprep.subr.bf16.mxu0 %v240
  %272 = vmatpush1.bf16.msra.mxu0 %v239
  %273 = vmatprep.subr.bf16.mxu0 %v242
  %274 = vmatpush1.bf16.msra.mxu0 %v241
  %275 = vmatprep.subr.bf16.mxu0 %v244
  %276 = vmatpush1.bf16.msra.mxu0 %v243
  %277 = vmatprep.subr.bf16.mxu0 0
  %278 = vmatpush1.bf16.msra.mxu0 0
  %279 = vmatprep.subr.bf16.mxu0 0
  %280 = vmatpush1.bf16.msra.mxu0 0
  %281 = vmatprep.subr.bf16.mxu0 0
  %282 = vmatpush1.bf16.msra.mxu0 0
  %283 = vmatprep.subr.bf16.mxu0 0
  %284 = vmatpush1.bf16.msra.mxu0 0
  %285 = vmatprep.subr.bf16.mxu0 0
  %286 = vmatpush1.bf16.msra.mxu0 0
  %287 = vmatprep.subr.bf16.mxu0 0
  %288 = vmatpush1.bf16.msra.mxu0 0
  %289 = vmatprep.subr.bf16.mxu0 0
  %290 = vmatpush1.bf16.msra.mxu0 0
  %291 = vmatprep.subr.bf16.mxu0 0
  %292 = vmatpush1.bf16.msra.mxu0 0
  %293 = vmatprep.mubr.bf16.mxu0 0
  %294 = vmatmul.mubr.bf16.gmra.mrb[0].mxu0 %v165
  %v295 = vpop.f32.mrb[0].mxu0
  %v296 = vadd.f32 0.0, %v295
  %v297 = vpop.f32.mrb[0].mxu0
  %v298 = vadd.f32 0.0, %v297
  %v299 = vpop.f32.mrb[0].mxu0
  %v300 = vadd.f32 0.0, %v299
  %v301 = vpop.f32.mrb[0].mxu0
  %v302 = vadd.f32 0.0, %v301
  %303 = vmatprep.mubr.bf16.mxu0 0
  %304 = vmatmul.mubr.bf16.gmra.mrb[0].mxu0 %v166
  %v305 = vpop.f32.mrb[0].mxu0
  %v306 = vadd.f32 0.0, %v305
  %v307 = vpop.f32.mrb[0].mxu0
  %v308 = vadd.f32 0.0, %v307
  %v309 = vpop.f32.mrb[0].mxu0
  %v310 = vadd.f32 0.0, %v309
  %v311 = vpop.f32.mrb[0].mxu0
  %v312 = vadd.f32 0.0, %v311
  %313 = vmatprep.mubr.bf16.mxu0 0
  %314 = vmatmul.mubr.bf16.gmra.mrb[0].mxu0 %v167
  %v315 = vpop.f32.mrb[0].mxu0
  %v316 = vadd.f32 0.0, %v315
  %v317 = vpop.f32.mrb[0].mxu0
  %v318 = vadd.f32 0.0, %v317
  %v319 = vpop.f32.mrb[0].mxu0
  %v320 = vadd.f32 0.0, %v319
  %v321 = vpop.f32.mrb[0].mxu0
  %v322 = vadd.f32 0.0, %v321
  %323 = vmatprep.mubr.bf16.mxu0 0
  %324 = vmatmul.mubr.bf16.gmra.mrb[0].mxu0 %v168
  %v325 = vpop.f32.mrb[0].mxu0
  %v326 = vadd.f32 0.0, %v325
  %v327 = vpop.f32.mrb[0].mxu0
  %v328 = vadd.f32 0.0, %v327
  %v329 = vpop.f32.mrb[0].mxu0
  %v330 = vadd.f32 0.0, %v329
  %v331 = vpop.f32.mrb[0].mxu0
  %v332 = vadd.f32 0.0, %v331
  %333 = vmatprep.mubr.bf16.mxu0 0
  %334 = vmatmul.mubr.bf16.gmra.mrb[0].mxu0 %v169
  %v335 = vpop.f32.mrb[0].mxu0
  %v336 = vadd.f32 0.0, %v335
  %v337 = vpop.f32.mrb[0].mxu0
  %v338 = vadd.f32 0.0, %v337
  %v339 = vpop.f32.mrb[0].mxu0
  %v340 = vadd.f32 0.0, %v339
  %v341 = vpop.f32.mrb[0].mxu0
  %v342 = vadd.f32 0.0, %v341
  %343 = vmatprep.mubr.bf16.mxu0 0
  %344 = vmatmul.mubr.bf16.gmra.mrb[0].mxu0 %v170
  %v345 = vpop.f32.mrb[0].mxu0
  %v346 = vadd.f32 0.0, %v345
  %v347 = vpop.f32.mrb[0].mxu0
  %v348 = vadd.f32 0.0, %v347
  %v349 = vpop.f32.mrb[0].mxu0
  %v350 = vadd.f32 0.0, %v349
  %v351 = vpop.f32.mrb[0].mxu0
  %v352 = vadd.f32 0.0, %v351
  %353 = vmatprep.mubr.bf16.mxu0 0
  %354 = vmatmul.mubr.bf16.gmra.mrb[0].mxu0 %v171
  %v355 = vpop.f32.mrb[0].mxu0
  %v356 = vadd.f32 0.0, %v355
  %v357 = vpop.f32.mrb[0].mxu0
  %v358 = vadd.f32 0.0, %v357
  %v359 = vpop.f32.mrb[0].mxu0
  %v360 = vadd.f32 0.0, %v359
  %v361 = vpop.f32.mrb[0].mxu0
  %v362 = vadd.f32 0.0, %v361
  %363 = vmatprep.mubr.bf16.mxu0 0
  %364 = vmatmul.mubr.bf16.gmra.mrb[0].mxu0 %v172
  %v365 = vpop.f32.mrb[0].mxu0
  %v366 = vadd.f32 0.0, %v365
  %v367 = vpop.f32.mrb[0].mxu0
  %v368 = vadd.f32 0.0, %v367
  %v369 = vpop.f32.mrb[0].mxu0
  %v370 = vadd.f32 0.0, %v369
  %v371 = vpop.f32.mrb[0].mxu0
  %v372 = vadd.f32 0.0, %v371
  %373 = vdwg.mxu0
  %v374 = vld [vmem:[%s0] sm:$0xf]
  %v375 = vld [vmem:[%s0 + $0x4] sm:$0xf]
  %v376 = vld [vmem:[%s0 + $0x8] sm:$0xf]
  %v377 = vld [vmem:[%s0 + $0xc] sm:$0xf]
  %v378 = vld [vmem:[%s0 + $0x10] sm:$0xf]
  %v379 = vld [vmem:[%s0 + $0x14] sm:$0xf]
  %v380 = vld [vmem:[%s0 + $0x18] sm:$0xf]
  %v381 = vld [vmem:[%s0 + $0x1c] sm:$0xf]
  %v382 = vld [vmem:[%s0 + $0x20] sm:$0xf]
  %v383 = vld [vmem:[%s0 + $0x24] sm:$0xf]
  %v384 = vld [vmem:[%s0 + $0x28] sm:$0xf]
  %v385 = vld [vmem:[%s0 + $0x2c] sm:$0xf]
  %v386 = vld [vmem:[%s0 + $0x30] sm:$0xf]
  %v387 = vld [vmem:[%s0 + $0x34] sm:$0xf]
  %v388 = vld [vmem:[%s0 + $0x38] sm:$0xf]
  %v389 = vld [vmem:[%s0 + $0x3c] sm:$0xf]
  %v390 = vpack.c.bf16 %v300, %v296
  %v391 = vpack.c.bf16 %v310, %v306
  %v392 = vpack.c.bf16 %v320, %v316
  %v393 = vpack.c.bf16 %v330, %v326
  %v394 = vpack.c.bf16 %v340, %v336
  %v395 = vpack.c.bf16 %v350, %v346
  %v396 = vpack.c.bf16 %v360, %v356
  %v397 = vpack.c.bf16 %v370, %v366
  %v414 = vunpack.c.l.b16 %v374
  %v415 = vunpack.c.l.b16 %v375
  %v416 = vunpack.c.l.b16 %v376
  %v417 = vunpack.c.l.b16 %v377
  %v418 = vunpack.c.l.b16 %v378
  %v419 = vunpack.c.l.b16 %v379
  %v420 = vunpack.c.l.b16 %v380
  %v421 = vunpack.c.l.b16 %v381
  %v422 = vunpack.c.l.b16 %v382
  %v423 = vunpack.c.l.b16 %v383
  %v424 = vunpack.c.l.b16 %v384
  %v425 = vunpack.c.l.b16 %v385
  %v426 = vunpack.c.l.b16 %v386
  %v427 = vunpack.c.l.b16 %v387
  %v428 = vunpack.c.l.b16 %v388
  %v429 = vunpack.c.l.b16 %v389
  %v430 = vpack.c.b16 %v415, %v414
  %v431 = vpack.c.b16 %v417, %v416
  %v432 = vpack.c.b16 %v419, %v418
  %v433 = vpack.c.b16 %v421, %v420
  %v434 = vpack.c.b16 %v423, %v422
  %v435 = vpack.c.b16 %v425, %v424
  %v436 = vpack.c.b16 %v427, %v426
  %v437 = vpack.c.b16 %v429, %v428
  %446 = vmatprep.subr.bf16.mxu0 0
  %447 = vmatpush1.bf16.msra.mxu0 %v390
  %448 = vmatprep.subr.bf16.mxu0 0
  %449 = vmatpush1.bf16.msra.mxu0 %v391
  %450 = vmatprep.subr.bf16.mxu0 0
  %451 = vmatpush1.bf16.msra.mxu0 %v392
  %452 = vmatprep.subr.bf16.mxu0 0
  %453 = vmatpush1.bf16.msra.mxu0 %v393
  %454 = vmatprep.subr.bf16.mxu0 0
  %455 = vmatpush1.bf16.msra.mxu0 %v394
  %456 = vmatprep.subr.bf16.mxu0 0
  %457 = vmatpush1.bf16.msra.mxu0 %v395
  %458 = vmatprep.subr.bf16.mxu0 0
  %459 = vmatpush1.bf16.msra.mxu0 %v396
  %460 = vmatprep.subr.bf16.mxu0 0
  %461 = vmatpush1.bf16.msra.mxu0 %v397
  %462 = vmatprep.subr.bf16.mxu0 0
  %463 = vmatpush1.bf16.msra.mxu0 0
  %464 = vmatprep.subr.bf16.mxu0 0
  %465 = vmatpush1.bf16.msra.mxu0 0
  %466 = vmatprep.subr.bf16.mxu0 0
  %467 = vmatpush1.bf16.msra.mxu0 0
  %468 = vmatprep.subr.bf16.mxu0 0
  %469 = vmatpush1.bf16.msra.mxu0 0
  %470 = vmatprep.subr.bf16.mxu0 0
  %471 = vmatpush1.bf16.msra.mxu0 0
  %472 = vmatprep.subr.bf16.mxu0 0
  %473 = vmatpush1.bf16.msra.mxu0 0
  %474 = vmatprep.subr.bf16.mxu0 0
  %475 = vmatpush1.bf16.msra.mxu0 0
  %476 = vmatprep.subr.bf16.mxu0 0
  %477 = vmatpush1.bf16.msra.mxu0 0
  %478 = vmatprep.mubr.bf16.mxu0 0
  %479 = vmatmul.mubr.bf16.gmra.mrb[0].mxu0 %v430
  %v480 = vpop.f32.mrb[0].mxu0
  %v481 = vadd.f32 0.0, %v480
  %v482 = vpop.f32.mrb[0].mxu0
  %v483 = vpop.f32.mrb[0].mxu0
  %v484 = vadd.f32 0.0, %v483
  %v485 = vpop.f32.mrb[0].mxu0
  %486 = vmatprep.mubr.bf16.mxu0 0
  %487 = vmatmul.mubr.bf16.gmra.mrb[0].mxu0 %v431
  %v488 = vpop.f32.mrb[0].mxu0
  %v489 = vadd.f32 0.0, %v488
  %v490 = vpop.f32.mrb[0].mxu0
  %v491 = vpop.f32.mrb[0].mxu0
  %v492 = vadd.f32 0.0, %v491
  %v493 = vpop.f32.mrb[0].mxu0
  %494 = vmatprep.mubr.bf16.mxu0 0
  %495 = vmatmul.mubr.bf16.gmra.mrb[0].mxu0 %v432
  %v496 = vpop.f32.mrb[0].mxu0
  %v497 = vadd.f32 0.0, %v496
  %v498 = vpop.f32.mrb[0].mxu0
  %v499 = vpop.f32.mrb[0].mxu0
  %v500 = vadd.f32 0.0, %v499
  %v501 = vpop.f32.mrb[0].mxu0
  %502 = vmatprep.mubr.bf16.mxu0 0
  %503 = vmatmul.mubr.bf16.gmra.mrb[0].mxu0 %v433
  %v504 = vpop.f32.mrb[0].mxu0
  %v505 = vadd.f32 0.0, %v504
  %v506 = vpop.f32.mrb[0].mxu0
  %v507 = vpop.f32.mrb[0].mxu0
  %v508 = vadd.f32 0.0, %v507
  %v509 = vpop.f32.mrb[0].mxu0
  %510 = vmatprep.mubr.bf16.mxu0 0
  %511 = vmatmul.mubr.bf16.gmra.mrb[0].mxu0 %v434
  %v512 = vpop.f32.mrb[0].mxu0
  %v513 = vadd.f32 0.0, %v512
  %v514 = vpop.f32.mrb[0].mxu0
  %v515 = vpop.f32.mrb[0].mxu0
  %v516 = vadd.f32 0.0, %v515
  %v517 = vpop.f32.mrb[0].mxu0
  %518 = vmatprep.mubr.bf16.mxu0 0
  %519 = vmatmul.mubr.bf16.gmra.mrb[0].mxu0 %v435
  %v520 = vpop.f32.mrb[0].mxu0
  %v521 = vadd.f32 0.0, %v520
  %v522 = vpop.f32.mrb[0].mxu0
  %v523 = vpop.f32.mrb[0].mxu0
  %v524 = vadd.f32 0.0, %v523
  %v525 = vpop.f32.mrb[0].mxu0
  %526 = vmatprep.mubr.bf16.mxu0 0
  %527 = vmatmul.mubr.bf16.gmra.mrb[0].mxu0 %v436
  %v528 = vpop.f32.mrb[0].mxu0
  %v529 = vadd.f32 0.0, %v528
  %v530 = vpop.f32.mrb[0].mxu0
  %v531 = vpop.f32.mrb[0].mxu0
  %v532 = vadd.f32 0.0, %v531
  %v533 = vpop.f32.mrb[0].mxu0
  %534 = vmatprep.mubr.bf16.mxu0 0
  %535 = vmatmul.mubr.bf16.gmra.mrb[0].mxu0 %v437
  %v536 = vpop.f32.mrb[0].mxu0
  %v537 = vadd.f32 0.0, %v536
  %v538 = vpop.f32.mrb[0].mxu0
  %v539 = vpop.f32.mrb[0].mxu0
  %v540 = vadd.f32 0.0, %v539
  %v541 = vpop.f32.mrb[0].mxu0
  %542 = vdwg.mxu0
  %544 = vset.pattern.permute.xlu0 0
  %545 = vperm.xlu0 %544, %v49
  %v546 = vpop.permute.xlu0 %545
  %549 = vset.pattern.permute.xlu0 0
  %550 = vperm.xlu0 %549, %v50
  %v551 = vpop.permute.xlu0 %550
  %554 = vset.pattern.permute.xlu0 0
  %555 = vperm.xlu0 %554, %v51
  %v556 = vpop.permute.xlu0 %555
  %559 = vset.pattern.permute.xlu0 0
  %560 = vperm.xlu0 %559, %v52
  %v561 = vpop.permute.xlu0 %560
  %564 = vset.pattern.permute.xlu0 0
  %565 = vperm.xlu0 %564, %v53
  %v566 = vpop.permute.xlu0 %565
  %569 = vset.pattern.permute.xlu0 0
  %570 = vperm.xlu0 %569, %v54
  %v571 = vpop.permute.xlu0 %570
  %574 = vset.pattern.permute.xlu0 0
  %575 = vperm.xlu0 %574, %v55
  %v576 = vpop.permute.xlu0 %575
  %579 = vset.pattern.permute.xlu0 0
  %580 = vperm.xlu0 %579, %v56
  %v581 = vpop.permute.xlu0 %580
  %584 = vset.pattern.permute.xlu0 0
  %585 = vperm.xlu0 %584, %v57
  %v586 = vpop.permute.xlu0 %585
  %589 = vset.pattern.permute.xlu0 0
  %590 = vperm.xlu0 %589, %v58
  %v591 = vpop.permute.xlu0 %590
  %594 = vset.pattern.permute.xlu0 0
  %595 = vperm.xlu0 %594, %v59
  %v596 = vpop.permute.xlu0 %595
  %599 = vset.pattern.permute.xlu0 0
  %600 = vperm.xlu0 %599, %v60
  %v601 = vpop.permute.xlu0 %600
  %604 = vset.pattern.permute.xlu0 0
  %605 = vperm.xlu0 %604, %v61
  %v606 = vpop.permute.xlu0 %605
  %609 = vset.pattern.permute.xlu0 0
  %610 = vperm.xlu0 %609, %v62
  %v611 = vpop.permute.xlu0 %610
  %614 = vset.pattern.permute.xlu0 0
  %615 = vperm.xlu0 %614, %v63
  %v616 = vpop.permute.xlu0 %615
  %619 = vset.pattern.permute.xlu0 0
  %620 = vperm.xlu0 %619, %v64
  %v621 = vpop.permute.xlu0 %620
  %v623 = vmul.f32 %v481, %v546
  %v624 = vmul.f32 %v484, %v551
  %v625 = vmul.f32 %v489, %v556
  %v626 = vmul.f32 %v492, %v561
  %v627 = vmul.f32 %v497, %v566
  %v628 = vmul.f32 %v500, %v571
  %v629 = vmul.f32 %v505, %v576
  %v630 = vmul.f32 %v508, %v581
  %v631 = vmul.f32 %v513, %v586
  %v632 = vmul.f32 %v516, %v591
  %v633 = vmul.f32 %v521, %v596
  %v634 = vmul.f32 %v524, %v601
  %v635 = vmul.f32 %v529, %v606
  %v636 = vmul.f32 %v532, %v611
  %v637 = vmul.f32 %v537, %v616
  %v638 = vmul.f32 %v540, %v621
  %v639 = vadd.f32 %v623, %v298
  %v640 = vadd.f32 %v624, %v302
  %v641 = vadd.f32 %v625, %v308
  %v642 = vadd.f32 %v626, %v312
  %v643 = vadd.f32 %v627, %v318
  %v644 = vadd.f32 %v628, %v322
  %v645 = vadd.f32 %v629, %v328
  %v646 = vadd.f32 %v630, %v332
  %v647 = vadd.f32 %v631, %v338
  %v648 = vadd.f32 %v632, %v342
  %v649 = vadd.f32 %v633, %v348
  %v650 = vadd.f32 %v634, %v352
  %v651 = vadd.f32 %v635, %v358
  %v652 = vadd.f32 %v636, %v362
  %v653 = vadd.f32 %v637, %v368
  %v654 = vadd.f32 %v638, %v372
  %v656 = vlaneseq
  %v657 = vshrl.u32 %v656, 7
  %v658 = vsub.s32 0, %v657
  %v659 = vrot.slane %v132, %v658
  %v661 = vadd.f32 %v639, %v659
  %v662 = vadd.f32 %v640, %v659
  %v663 = vadd.f32 %v641, %v659
  %v664 = vadd.f32 %v642, %v659
  %v665 = vadd.f32 %v643, %v659
  %v666 = vadd.f32 %v644, %v659
  %v667 = vadd.f32 %v645, %v659
  %v668 = vadd.f32 %v646, %v659
  %v669 = vadd.f32 %v647, %v659
  %v670 = vadd.f32 %v648, %v659
  %v671 = vadd.f32 %v649, %v659
  %v672 = vadd.f32 %v650, %v659
  %v673 = vadd.f32 %v651, %v659
  %v674 = vadd.f32 %v652, %v659
  %v675 = vadd.f32 %v653, %v659
  %v676 = vadd.f32 %v654, %v659
  %v677 = vxor.u32 %v100, 2808649522
  %v678 = vxor.u32 %v101, 2808649522
  %v679 = vxor.u32 %v102, 2808649522
  %v680 = vxor.u32 %v103, 2808649522
  %v681 = vxor.u32 %v104, 2808649522
  %v682 = vxor.u32 %v105, 2808649522
  %v683 = vxor.u32 %v106, 2808649522
  %v684 = vxor.u32 %v107, 2808649522
  %v685 = vxor.u32 %v108, 2808649522
  %v686 = vxor.u32 %v109, 2808649522
  %v687 = vxor.u32 %v110, 2808649522
  %v688 = vxor.u32 %v111, 2808649522
  %v689 = vxor.u32 %v112, 2808649522
  %v690 = vxor.u32 %v113, 2808649522
  %v691 = vxor.u32 %v114, 2808649522
  %v692 = vxor.u32 %v115, 2808649522
  %v693 = vmul.u32 %v677, 1664525
  %v694 = vmul.u32 %v678, 1664525
  %v695 = vmul.u32 %v679, 1664525
  %v696 = vmul.u32 %v680, 1664525
  %v697 = vmul.u32 %v681, 1664525
  %v698 = vmul.u32 %v682, 1664525
  %v699 = vmul.u32 %v683, 1664525
  %v700 = vmul.u32 %v684, 1664525
  %v701 = vmul.u32 %v685, 1664525
  %v702 = vmul.u32 %v686, 1664525
  %v703 = vmul.u32 %v687, 1664525
  %v704 = vmul.u32 %v688, 1664525
  %v705 = vmul.u32 %v689, 1664525
  %v706 = vmul.u32 %v690, 1664525
  %v707 = vmul.u32 %v691, 1664525
  %v708 = vmul.u32 %v692, 1664525
  %v709 = vadd.s32 %v693, 1013904223
  %v710 = vadd.s32 %v694, 1013904223
  %v711 = vadd.s32 %v695, 1013904223
  %v712 = vadd.s32 %v696, 1013904223
  %v713 = vadd.s32 %v697, 1013904223
  %v714 = vadd.s32 %v698, 1013904223
  %v715 = vadd.s32 %v699, 1013904223
  %v716 = vadd.s32 %v700, 1013904223
  %v717 = vadd.s32 %v701, 1013904223
  %v718 = vadd.s32 %v702, 1013904223
  %v719 = vadd.s32 %v703, 1013904223
  %v720 = vadd.s32 %v704, 1013904223
  %v721 = vadd.s32 %v705, 1013904223
  %v722 = vadd.s32 %v706, 1013904223
  %v723 = vadd.s32 %v707, 1013904223
  %v724 = vadd.s32 %v708, 1013904223
  %vm725 = vcmp.lt.s32.totalorder %v709, 0
  %vm726 = vcmp.lt.s32.totalorder %v710, 0
  %vm727 = vcmp.lt.s32.totalorder %v711, 0
  %vm728 = vcmp.lt.s32.totalorder %v712, 0
  %vm729 = vcmp.lt.s32.totalorder %v713, 0
  %vm730 = vcmp.lt.s32.totalorder %v714, 0
  %vm731 = vcmp.lt.s32.totalorder %v715, 0
  %vm732 = vcmp.lt.s32.totalorder %v716, 0
  %vm733 = vcmp.lt.s32.totalorder %v717, 0
  %vm734 = vcmp.lt.s32.totalorder %v718, 0
  %vm735 = vcmp.lt.s32.totalorder %v719, 0
  %vm736 = vcmp.lt.s32.totalorder %v720, 0
  %vm737 = vcmp.lt.s32.totalorder %v721, 0
  %vm738 = vcmp.lt.s32.totalorder %v722, 0
  %vm739 = vcmp.lt.s32.totalorder %v723, 0
  %vm740 = vcmp.lt.s32.totalorder %v724, 0
  %vm741 = vcmp.gt.f32.partialorder %v661, 0.0
  %vm742 = vcmp.gt.f32.partialorder %v662, 0.0
  %vm743 = vcmp.gt.f32.partialorder %v663, 0.0
  %vm744 = vcmp.gt.f32.partialorder %v664, 0.0
  %vm745 = vcmp.gt.f32.partialorder %v665, 0.0
  %vm746 = vcmp.gt.f32.partialorder %v666, 0.0
  %vm747 = vcmp.gt.f32.partialorder %v667, 0.0
  %vm748 = vcmp.gt.f32.partialorder %v668, 0.0
  %vm749 = vcmp.gt.f32.partialorder %v669, 0.0
  %vm750 = vcmp.gt.f32.partialorder %v670, 0.0
  %vm751 = vcmp.gt.f32.partialorder %v671, 0.0
  %vm752 = vcmp.gt.f32.partialorder %v672, 0.0
  %vm753 = vcmp.gt.f32.partialorder %v673, 0.0
  %vm754 = vcmp.gt.f32.partialorder %v674, 0.0
  %vm755 = vcmp.gt.f32.partialorder %v675, 0.0
  %vm756 = vcmp.gt.f32.partialorder %v676, 0.0
  %vm757 = vmand %vm725, %vm741
  %vm758 = vmand %vm726, %vm742
  %vm759 = vmand %vm727, %vm743
  %vm760 = vmand %vm728, %vm744
  %vm761 = vmand %vm729, %vm745
  %vm762 = vmand %vm730, %vm746
  %vm763 = vmand %vm731, %vm747
  %vm764 = vmand %vm732, %vm748
  %vm765 = vmand %vm733, %vm749
  %vm766 = vmand %vm734, %vm750
  %vm767 = vmand %vm735, %vm751
  %vm768 = vmand %vm736, %vm752
  %vm769 = vmand %vm737, %vm753
  %vm770 = vmand %vm738, %vm754
  %vm771 = vmand %vm739, %vm755
  %vm772 = vmand %vm740, %vm756
  %v773 = vsel %vm757, %v661, 0.0
  %v774 = vsel %vm758, %v662, 0.0
  %v775 = vsel %vm759, %v663, 0.0
  %v776 = vsel %vm760, %v664, 0.0
  %v777 = vsel %vm761, %v665, 0.0
  %v778 = vsel %vm762, %v666, 0.0
  %v779 = vsel %vm763, %v667, 0.0
  %v780 = vsel %vm764, %v668, 0.0
  %v781 = vsel %vm765, %v669, 0.0
  %v782 = vsel %vm766, %v670, 0.0
  %v783 = vsel %vm767, %v671, 0.0
  %v784 = vsel %vm768, %v672, 0.0
  %v785 = vsel %vm769, %v673, 0.0
  %v786 = vsel %vm770, %v674, 0.0
  %v787 = vsel %vm771, %v675, 0.0
  %v788 = vsel %vm772, %v676, 0.0
  %v789 = vld [vmem:[%s5] sm:$0xff]
  %v790 = vld [vmem:[%s5 + $0x8] sm:$0xff]
  %v791 = vld [vmem:[%s5 + $0x10] sm:$0xff]
  %v792 = vld [vmem:[%s5 + $0x18] sm:$0xff]
  %v793 = vld [vmem:[%s5 + $0x20] sm:$0xff]
  %v794 = vld [vmem:[%s5 + $0x28] sm:$0xff]
  %v795 = vld [vmem:[%s5 + $0x30] sm:$0xff]
  %v796 = vld [vmem:[%s5 + $0x38] sm:$0xff]
  %v797 = vld [vmem:[%s5 + $0x40] sm:$0xff]
  %v798 = vld [vmem:[%s5 + $0x48] sm:$0xff]
  %v799 = vld [vmem:[%s5 + $0x50] sm:$0xff]
  %v800 = vld [vmem:[%s5 + $0x58] sm:$0xff]
  %v801 = vld [vmem:[%s5 + $0x60] sm:$0xff]
  %v802 = vld [vmem:[%s5 + $0x68] sm:$0xff]
  %v803 = vld [vmem:[%s5 + $0x70] sm:$0xff]
  %v804 = vld [vmem:[%s5 + $0x78] sm:$0xff]
  %v805 = vld [vmem:[%s6] sm:$0x1]
  %v806 = vpack.c.bf16 %v774, %v773
  %v807 = vpack.c.bf16 %v776, %v775
  %v808 = vpack.c.bf16 %v778, %v777
  %v809 = vpack.c.bf16 %v780, %v779
  %v810 = vpack.c.bf16 %v782, %v781
  %v811 = vpack.c.bf16 %v784, %v783
  %v812 = vpack.c.bf16 %v786, %v785
  %v813 = vpack.c.bf16 %v788, %v787
  %v830 = vunpack.c.l.b16 %v789
  %v831 = vunpack.c.h.b16 %v789
  %v832 = vunpack.c.l.b16 %v790
  %v833 = vunpack.c.h.b16 %v790
  %v834 = vunpack.c.l.b16 %v791
  %v835 = vunpack.c.h.b16 %v791
  %v836 = vunpack.c.l.b16 %v792
  %v837 = vunpack.c.h.b16 %v792
  %v838 = vunpack.c.l.b16 %v793
  %v839 = vunpack.c.h.b16 %v793
  %v840 = vunpack.c.l.b16 %v794
  %v841 = vunpack.c.h.b16 %v794
  %v842 = vunpack.c.l.b16 %v795
  %v843 = vunpack.c.h.b16 %v795
  %v844 = vunpack.c.l.b16 %v796
  %v845 = vunpack.c.h.b16 %v796
  %v846 = vunpack.c.l.b16 %v797
  %v847 = vunpack.c.h.b16 %v797
  %v848 = vunpack.c.l.b16 %v798
  %v849 = vunpack.c.h.b16 %v798
  %v850 = vunpack.c.l.b16 %v799
  %v851 = vunpack.c.h.b16 %v799
  %v852 = vunpack.c.l.b16 %v800
  %v853 = vunpack.c.h.b16 %v800
  %v854 = vunpack.c.l.b16 %v801
  %v855 = vunpack.c.h.b16 %v801
  %v856 = vunpack.c.l.b16 %v802
  %v857 = vunpack.c.h.b16 %v802
  %v858 = vunpack.c.l.b16 %v803
  %v859 = vunpack.c.h.b16 %v803
  %v860 = vunpack.c.l.b16 %v804
  %v861 = vunpack.c.h.b16 %v804
  %v862 = vpack.c.b16 %v832, %v830
  %v863 = vpack.c.b16 %v833, %v831
  %v864 = vpack.c.b16 %v836, %v834
  %v865 = vpack.c.b16 %v837, %v835
  %v866 = vpack.c.b16 %v840, %v838
  %v867 = vpack.c.b16 %v841, %v839
  %v868 = vpack.c.b16 %v844, %v842
  %v869 = vpack.c.b16 %v845, %v843
  %v870 = vpack.c.b16 %v848, %v846
  %v871 = vpack.c.b16 %v849, %v847
  %v872 = vpack.c.b16 %v852, %v850
  %v873 = vpack.c.b16 %v853, %v851
  %v874 = vpack.c.b16 %v856, %v854
  %v875 = vpack.c.b16 %v857, %v855
  %v876 = vpack.c.b16 %v860, %v858
  %v877 = vpack.c.b16 %v861, %v859
  %894 = vmatprep.subr.bf16.mxu0 %v863
  %895 = vmatpush1.bf16.msra.mxu0 %v862
  %896 = vmatprep.subr.bf16.mxu0 %v865
  %897 = vmatpush1.bf16.msra.mxu0 %v864
  %898 = vmatprep.subr.bf16.mxu0 %v867
  %899 = vmatpush1.bf16.msra.mxu0 %v866
  %900 = vmatprep.subr.bf16.mxu0 %v869
  %901 = vmatpush1.bf16.msra.mxu0 %v868
  %902 = vmatprep.subr.bf16.mxu0 %v871
  %903 = vmatpush1.bf16.msra.mxu0 %v870
  %904 = vmatprep.subr.bf16.mxu0 %v873
  %905 = vmatpush1.bf16.msra.mxu0 %v872
  %906 = vmatprep.subr.bf16.mxu0 %v875
  %907 = vmatpush1.bf16.msra.mxu0 %v874
  %908 = vmatprep.subr.bf16.mxu0 %v877
  %909 = vmatpush1.bf16.msra.mxu0 %v876
  %910 = vmatprep.subr.bf16.mxu0 0
  %911 = vmatpush1.bf16.msra.mxu0 0
  %912 = vmatprep.subr.bf16.mxu0 0
  %913 = vmatpush1.bf16.msra.mxu0 0
  %914 = vmatprep.subr.bf16.mxu0 0
  %915 = vmatpush1.bf16.msra.mxu0 0
  %916 = vmatprep.subr.bf16.mxu0 0
  %917 = vmatpush1.bf16.msra.mxu0 0
  %918 = vmatprep.subr.bf16.mxu0 0
  %919 = vmatpush1.bf16.msra.mxu0 0
  %920 = vmatprep.subr.bf16.mxu0 0
  %921 = vmatpush1.bf16.msra.mxu0 0
  %922 = vmatprep.subr.bf16.mxu0 0
  %923 = vmatpush1.bf16.msra.mxu0 0
  %924 = vmatprep.subr.bf16.mxu0 0
  %925 = vmatpush1.bf16.msra.mxu0 0
  %926 = vmatprep.mubr.bf16.mxu0 0
  %927 = vmatmul.mubr.bf16.gmra.mrb[0].mxu0 %v806
  %v928 = vpop.f32.mrb[0].mxu0
  %v929 = vadd.f32 0.0, %v928
  %v930 = vpop.f32.mrb[0].mxu0
  %v931 = vadd.f32 0.0, %v930
  %v932 = vpop.f32.mrb[0].mxu0
  %v933 = vadd.f32 0.0, %v932
  %v934 = vpop.f32.mrb[0].mxu0
  %v935 = vadd.f32 0.0, %v934
  %936 = vmatprep.mubr.bf16.mxu0 0
  %937 = vmatmul.mubr.bf16.gmra.mrb[0].mxu0 %v807
  %v938 = vpop.f32.mrb[0].mxu0
  %v939 = vadd.f32 0.0, %v938
  %v940 = vpop.f32.mrb[0].mxu0
  %v941 = vadd.f32 0.0, %v940
  %v942 = vpop.f32.mrb[0].mxu0
  %v943 = vadd.f32 0.0, %v942
  %v944 = vpop.f32.mrb[0].mxu0
  %v945 = vadd.f32 0.0, %v944
  %946 = vmatprep.mubr.bf16.mxu0 0
  %947 = vmatmul.mubr.bf16.gmra.mrb[0].mxu0 %v808
  %v948 = vpop.f32.mrb[0].mxu0
  %v949 = vadd.f32 0.0, %v948
  %v950 = vpop.f32.mrb[0].mxu0
  %v951 = vadd.f32 0.0, %v950
  %v952 = vpop.f32.mrb[0].mxu0
  %v953 = vadd.f32 0.0, %v952
  %v954 = vpop.f32.mrb[0].mxu0
  %v955 = vadd.f32 0.0, %v954
  %956 = vmatprep.mubr.bf16.mxu0 0
  %957 = vmatmul.mubr.bf16.gmra.mrb[0].mxu0 %v809
  %v958 = vpop.f32.mrb[0].mxu0
  %v959 = vadd.f32 0.0, %v958
  %v960 = vpop.f32.mrb[0].mxu0
  %v961 = vadd.f32 0.0, %v960
  %v962 = vpop.f32.mrb[0].mxu0
  %v963 = vadd.f32 0.0, %v962
  %v964 = vpop.f32.mrb[0].mxu0
  %v965 = vadd.f32 0.0, %v964
  %966 = vmatprep.mubr.bf16.mxu0 0
  %967 = vmatmul.mubr.bf16.gmra.mrb[0].mxu0 %v810
  %v968 = vpop.f32.mrb[0].mxu0
  %v969 = vadd.f32 0.0, %v968
  %v970 = vpop.f32.mrb[0].mxu0
  %v971 = vadd.f32 0.0, %v970
  %v972 = vpop.f32.mrb[0].mxu0
  %v973 = vadd.f32 0.0, %v972
  %v974 = vpop.f32.mrb[0].mxu0
  %v975 = vadd.f32 0.0, %v974
  %976 = vmatprep.mubr.bf16.mxu0 0
  %977 = vmatmul.mubr.bf16.gmra.mrb[0].mxu0 %v811
  %v978 = vpop.f32.mrb[0].mxu0
  %v979 = vadd.f32 0.0, %v978
  %v980 = vpop.f32.mrb[0].mxu0
  %v981 = vadd.f32 0.0, %v980
  %v982 = vpop.f32.mrb[0].mxu0
  %v983 = vadd.f32 0.0, %v982
  %v984 = vpop.f32.mrb[0].mxu0
  %v985 = vadd.f32 0.0, %v984
  %986 = vmatprep.mubr.bf16.mxu0 0
  %987 = vmatmul.mubr.bf16.gmra.mrb[0].mxu0 %v812
  %v988 = vpop.f32.mrb[0].mxu0
  %v989 = vadd.f32 0.0, %v988
  %v990 = vpop.f32.mrb[0].mxu0
  %v991 = vadd.f32 0.0, %v990
  %v992 = vpop.f32.mrb[0].mxu0
  %v993 = vadd.f32 0.0, %v992
  %v994 = vpop.f32.mrb[0].mxu0
  %v995 = vadd.f32 0.0, %v994
  %996 = vmatprep.mubr.bf16.mxu0 0
  %997 = vmatmul.mubr.bf16.gmra.mrb[0].mxu0 %v813
  %v998 = vpop.f32.mrb[0].mxu0
  %v999 = vadd.f32 0.0, %v998
  %v1000 = vpop.f32.mrb[0].mxu0
  %v1001 = vadd.f32 0.0, %v1000
  %v1002 = vpop.f32.mrb[0].mxu0
  %v1003 = vadd.f32 0.0, %v1002
  %v1004 = vpop.f32.mrb[0].mxu0
  %v1005 = vadd.f32 0.0, %v1004
  %1006 = vdwg.mxu0
  %v1007 = vpack.c.bf16 %v933, %v929
  %v1008 = vpack.c.bf16 %v943, %v939
  %v1009 = vpack.c.bf16 %v953, %v949
  %v1010 = vpack.c.bf16 %v963, %v959
  %v1011 = vpack.c.bf16 %v973, %v969
  %v1012 = vpack.c.bf16 %v983, %v979
  %v1013 = vpack.c.bf16 %v993, %v989
  %v1014 = vpack.c.bf16 %v1003, %v999
  %1015 = vmatprep.subr.bf16.mxu0 0
  %1016 = vmatpush1.bf16.msra.mxu0 %v1007
  %1017 = vmatprep.subr.bf16.mxu0 0
  %1018 = vmatpush1.bf16.msra.mxu0 %v1008
  %1019 = vmatprep.subr.bf16.mxu0 0
  %1020 = vmatpush1.bf16.msra.mxu0 %v1009
  %1021 = vmatprep.subr.bf16.mxu0 0
  %1022 = vmatpush1.bf16.msra.mxu0 %v1010
  %1023 = vmatprep.subr.bf16.mxu0 0
  %1024 = vmatpush1.bf16.msra.mxu0 %v1011
  %1025 = vmatprep.subr.bf16.mxu0 0
  %1026 = vmatpush1.bf16.msra.mxu0 %v1012
  %1027 = vmatprep.subr.bf16.mxu0 0
  %1028 = vmatpush1.bf16.msra.mxu0 %v1013
  %1029 = vmatprep.subr.bf16.mxu0 0
  %1030 = vmatpush1.bf16.msra.mxu0 %v1014
  %1031 = vmatprep.subr.bf16.mxu0 0
  %1032 = vmatpush1.bf16.msra.mxu0 0
  %1033 = vmatprep.subr.bf16.mxu0 0
  %1034 = vmatpush1.bf16.msra.mxu0 0
  %1035 = vmatprep.subr.bf16.mxu0 0
  %1036 = vmatpush1.bf16.msra.mxu0 0
  %1037 = vmatprep.subr.bf16.mxu0 0
  %1038 = vmatpush1.bf16.msra.mxu0 0
  %1039 = vmatprep.subr.bf16.mxu0 0
  %1040 = vmatpush1.bf16.msra.mxu0 0
  %1041 = vmatprep.subr.bf16.mxu0 0
  %1042 = vmatpush1.bf16.msra.mxu0 0
  %1043 = vmatprep.subr.bf16.mxu0 0
  %1044 = vmatpush1.bf16.msra.mxu0 0
  %1045 = vmatprep.subr.bf16.mxu0 0
  %1046 = vmatpush1.bf16.msra.mxu0 0
  %1047 = vmatprep.mubr.bf16.mxu0 0
  %1048 = vmatmul.mubr.bf16.gmra.mrb[0].mxu0 %v430
  %v1049 = vpop.f32.mrb[0].mxu0
  %v1050 = vadd.f32 0.0, %v1049
  %v1051 = vpop.f32.mrb[0].mxu0
  %v1052 = vpop.f32.mrb[0].mxu0
  %v1053 = vadd.f32 0.0, %v1052
  %v1054 = vpop.f32.mrb[0].mxu0
  %1055 = vmatprep.mubr.bf16.mxu0 0
  %1056 = vmatmul.mubr.bf16.gmra.mrb[0].mxu0 %v431
  %v1057 = vpop.f32.mrb[0].mxu0
  %v1058 = vadd.f32 0.0, %v1057
  %v1059 = vpop.f32.mrb[0].mxu0
  %v1060 = vpop.f32.mrb[0].mxu0
  %v1061 = vadd.f32 0.0, %v1060
  %v1062 = vpop.f32.mrb[0].mxu0
  %1063 = vmatprep.mubr.bf16.mxu0 0
  %1064 = vmatmul.mubr.bf16.gmra.mrb[0].mxu0 %v432
  %v1065 = vpop.f32.mrb[0].mxu0
  %v1066 = vadd.f32 0.0, %v1065
  %v1067 = vpop.f32.mrb[0].mxu0
  %v1068 = vpop.f32.mrb[0].mxu0
  %v1069 = vadd.f32 0.0, %v1068
  %v1070 = vpop.f32.mrb[0].mxu0
  %1071 = vmatprep.mubr.bf16.mxu0 0
  %1072 = vmatmul.mubr.bf16.gmra.mrb[0].mxu0 %v433
  %v1073 = vpop.f32.mrb[0].mxu0
  %v1074 = vadd.f32 0.0, %v1073
  %v1075 = vpop.f32.mrb[0].mxu0
  %v1076 = vpop.f32.mrb[0].mxu0
  %v1077 = vadd.f32 0.0, %v1076
  %v1078 = vpop.f32.mrb[0].mxu0
  %1079 = vmatprep.mubr.bf16.mxu0 0
  %1080 = vmatmul.mubr.bf16.gmra.mrb[0].mxu0 %v434
  %v1081 = vpop.f32.mrb[0].mxu0
  %v1082 = vadd.f32 0.0, %v1081
  %v1083 = vpop.f32.mrb[0].mxu0
  %v1084 = vpop.f32.mrb[0].mxu0
  %v1085 = vadd.f32 0.0, %v1084
  %v1086 = vpop.f32.mrb[0].mxu0
  %1087 = vmatprep.mubr.bf16.mxu0 0
  %1088 = vmatmul.mubr.bf16.gmra.mrb[0].mxu0 %v435
  %v1089 = vpop.f32.mrb[0].mxu0
  %v1090 = vadd.f32 0.0, %v1089
  %v1091 = vpop.f32.mrb[0].mxu0
  %v1092 = vpop.f32.mrb[0].mxu0
  %v1093 = vadd.f32 0.0, %v1092
  %v1094 = vpop.f32.mrb[0].mxu0
  %1095 = vmatprep.mubr.bf16.mxu0 0
  %1096 = vmatmul.mubr.bf16.gmra.mrb[0].mxu0 %v436
  %v1097 = vpop.f32.mrb[0].mxu0
  %v1098 = vadd.f32 0.0, %v1097
  %v1099 = vpop.f32.mrb[0].mxu0
  %v1100 = vpop.f32.mrb[0].mxu0
  %v1101 = vadd.f32 0.0, %v1100
  %v1102 = vpop.f32.mrb[0].mxu0
  %1103 = vmatprep.mubr.bf16.mxu0 0
  %1104 = vmatmul.mubr.bf16.gmra.mrb[0].mxu0 %v437
  %v1105 = vpop.f32.mrb[0].mxu0
  %v1106 = vadd.f32 0.0, %v1105
  %v1107 = vpop.f32.mrb[0].mxu0
  %v1108 = vpop.f32.mrb[0].mxu0
  %v1109 = vadd.f32 0.0, %v1108
  %v1110 = vpop.f32.mrb[0].mxu0
  %1111 = vdwg.mxu0
  %v1112 = vmul.f32 %v1050, %v546
  %v1113 = vmul.f32 %v1053, %v551
  %v1114 = vmul.f32 %v1058, %v556
  %v1115 = vmul.f32 %v1061, %v561
  %v1116 = vmul.f32 %v1066, %v566
  %v1117 = vmul.f32 %v1069, %v571
  %v1118 = vmul.f32 %v1074, %v576
  %v1119 = vmul.f32 %v1077, %v581
  %v1120 = vmul.f32 %v1082, %v586
  %v1121 = vmul.f32 %v1085, %v591
  %v1122 = vmul.f32 %v1090, %v596
  %v1123 = vmul.f32 %v1093, %v601
  %v1124 = vmul.f32 %v1098, %v606
  %v1125 = vmul.f32 %v1101, %v611
  %v1126 = vmul.f32 %v1106, %v616
  %v1127 = vmul.f32 %v1109, %v621
  %v1128 = vadd.f32 %v1112, %v931
  %v1129 = vadd.f32 %v1113, %v935
  %v1130 = vadd.f32 %v1114, %v941
  %v1131 = vadd.f32 %v1115, %v945
  %v1132 = vadd.f32 %v1116, %v951
  %v1133 = vadd.f32 %v1117, %v955
  %v1134 = vadd.f32 %v1118, %v961
  %v1135 = vadd.f32 %v1119, %v965
  %v1136 = vadd.f32 %v1120, %v971
  %v1137 = vadd.f32 %v1121, %v975
  %v1138 = vadd.f32 %v1122, %v981
  %v1139 = vadd.f32 %v1123, %v985
  %v1140 = vadd.f32 %v1124, %v991
  %v1141 = vadd.f32 %v1125, %v995
  %v1142 = vadd.f32 %v1126, %v1001
  %v1143 = vadd.f32 %v1127, %v1005
  %v1145 = vlaneseq
  %v1146 = vshrl.u32 %v1145, 7
  %v1147 = vsub.s32 0, %v1146
  %v1148 = vrot.slane %v805, %v1147
  %v1150 = vadd.f32 %v1128, %v1148
  %v1151 = vadd.f32 %v1129, %v1148
  %v1152 = vadd.f32 %v1130, %v1148
  %v1153 = vadd.f32 %v1131, %v1148
  %v1154 = vadd.f32 %v1132, %v1148
  %v1155 = vadd.f32 %v1133, %v1148
  %v1156 = vadd.f32 %v1134, %v1148
  %v1157 = vadd.f32 %v1135, %v1148
  %v1158 = vadd.f32 %v1136, %v1148
  %v1159 = vadd.f32 %v1137, %v1148
  %v1160 = vadd.f32 %v1138, %v1148
  %v1161 = vadd.f32 %v1139, %v1148
  %v1162 = vadd.f32 %v1140, %v1148
  %v1163 = vadd.f32 %v1141, %v1148
  %v1164 = vadd.f32 %v1142, %v1148
  %v1165 = vadd.f32 %v1143, %v1148
  %v1166 = vxor.u32 %v100, 1168117987
  %v1167 = vxor.u32 %v101, 1168117987
  %v1168 = vxor.u32 %v102, 1168117987
  %v1169 = vxor.u32 %v103, 1168117987
  %v1170 = vxor.u32 %v104, 1168117987
  %v1171 = vxor.u32 %v105, 1168117987
  %v1172 = vxor.u32 %v106, 1168117987
  %v1173 = vxor.u32 %v107, 1168117987
  %v1174 = vxor.u32 %v108, 1168117987
  %v1175 = vxor.u32 %v109, 1168117987
  %v1176 = vxor.u32 %v110, 1168117987
  %v1177 = vxor.u32 %v111, 1168117987
  %v1178 = vxor.u32 %v112, 1168117987
  %v1179 = vxor.u32 %v113, 1168117987
  %v1180 = vxor.u32 %v114, 1168117987
  %v1181 = vxor.u32 %v115, 1168117987
  %v1182 = vmul.u32 %v1166, 1664525
  %v1183 = vmul.u32 %v1167, 1664525
  %v1184 = vmul.u32 %v1168, 1664525
  %v1185 = vmul.u32 %v1169, 1664525
  %v1186 = vmul.u32 %v1170, 1664525
  %v1187 = vmul.u32 %v1171, 1664525
  %v1188 = vmul.u32 %v1172, 1664525
  %v1189 = vmul.u32 %v1173, 1664525
  %v1190 = vmul.u32 %v1174, 1664525
  %v1191 = vmul.u32 %v1175, 1664525
  %v1192 = vmul.u32 %v1176, 1664525
  %v1193 = vmul.u32 %v1177, 1664525
  %v1194 = vmul.u32 %v1178, 1664525
  %v1195 = vmul.u32 %v1179, 1664525
  %v1196 = vmul.u32 %v1180, 1664525
  %v1197 = vmul.u32 %v1181, 1664525
  %v1198 = vadd.s32 %v1182, 1013904223
  %v1199 = vadd.s32 %v1183, 1013904223
  %v1200 = vadd.s32 %v1184, 1013904223
  %v1201 = vadd.s32 %v1185, 1013904223
  %v1202 = vadd.s32 %v1186, 1013904223
  %v1203 = vadd.s32 %v1187, 1013904223
  %v1204 = vadd.s32 %v1188, 1013904223
  %v1205 = vadd.s32 %v1189, 1013904223
  %v1206 = vadd.s32 %v1190, 1013904223
  %v1207 = vadd.s32 %v1191, 1013904223
  %v1208 = vadd.s32 %v1192, 1013904223
  %v1209 = vadd.s32 %v1193, 1013904223
  %v1210 = vadd.s32 %v1194, 1013904223
  %v1211 = vadd.s32 %v1195, 1013904223
  %v1212 = vadd.s32 %v1196, 1013904223
  %v1213 = vadd.s32 %v1197, 1013904223
  %vm1214 = vcmp.lt.s32.totalorder %v1198, 0
  %vm1215 = vcmp.lt.s32.totalorder %v1199, 0
  %vm1216 = vcmp.lt.s32.totalorder %v1200, 0
  %vm1217 = vcmp.lt.s32.totalorder %v1201, 0
  %vm1218 = vcmp.lt.s32.totalorder %v1202, 0
  %vm1219 = vcmp.lt.s32.totalorder %v1203, 0
  %vm1220 = vcmp.lt.s32.totalorder %v1204, 0
  %vm1221 = vcmp.lt.s32.totalorder %v1205, 0
  %vm1222 = vcmp.lt.s32.totalorder %v1206, 0
  %vm1223 = vcmp.lt.s32.totalorder %v1207, 0
  %vm1224 = vcmp.lt.s32.totalorder %v1208, 0
  %vm1225 = vcmp.lt.s32.totalorder %v1209, 0
  %vm1226 = vcmp.lt.s32.totalorder %v1210, 0
  %vm1227 = vcmp.lt.s32.totalorder %v1211, 0
  %vm1228 = vcmp.lt.s32.totalorder %v1212, 0
  %vm1229 = vcmp.lt.s32.totalorder %v1213, 0
  %vm1230 = vcmp.gt.f32.partialorder %v1150, 0.0
  %vm1231 = vcmp.gt.f32.partialorder %v1151, 0.0
  %vm1232 = vcmp.gt.f32.partialorder %v1152, 0.0
  %vm1233 = vcmp.gt.f32.partialorder %v1153, 0.0
  %vm1234 = vcmp.gt.f32.partialorder %v1154, 0.0
  %vm1235 = vcmp.gt.f32.partialorder %v1155, 0.0
  %vm1236 = vcmp.gt.f32.partialorder %v1156, 0.0
  %vm1237 = vcmp.gt.f32.partialorder %v1157, 0.0
  %vm1238 = vcmp.gt.f32.partialorder %v1158, 0.0
  %vm1239 = vcmp.gt.f32.partialorder %v1159, 0.0
  %vm1240 = vcmp.gt.f32.partialorder %v1160, 0.0
  %vm1241 = vcmp.gt.f32.partialorder %v1161, 0.0
  %vm1242 = vcmp.gt.f32.partialorder %v1162, 0.0
  %vm1243 = vcmp.gt.f32.partialorder %v1163, 0.0
  %vm1244 = vcmp.gt.f32.partialorder %v1164, 0.0
  %vm1245 = vcmp.gt.f32.partialorder %v1165, 0.0
  %vm1246 = vmand %vm1214, %vm1230
  %vm1247 = vmand %vm1215, %vm1231
  %vm1248 = vmand %vm1216, %vm1232
  %vm1249 = vmand %vm1217, %vm1233
  %vm1250 = vmand %vm1218, %vm1234
  %vm1251 = vmand %vm1219, %vm1235
  %vm1252 = vmand %vm1220, %vm1236
  %vm1253 = vmand %vm1221, %vm1237
  %vm1254 = vmand %vm1222, %vm1238
  %vm1255 = vmand %vm1223, %vm1239
  %vm1256 = vmand %vm1224, %vm1240
  %vm1257 = vmand %vm1225, %vm1241
  %vm1258 = vmand %vm1226, %vm1242
  %vm1259 = vmand %vm1227, %vm1243
  %vm1260 = vmand %vm1228, %vm1244
  %vm1261 = vmand %vm1229, %vm1245
  %v1262 = vsel %vm1246, %v1150, 0.0
  %v1263 = vsel %vm1247, %v1151, 0.0
  %v1264 = vsel %vm1248, %v1152, 0.0
  %v1265 = vsel %vm1249, %v1153, 0.0
  %v1266 = vsel %vm1250, %v1154, 0.0
  %v1267 = vsel %vm1251, %v1155, 0.0
  %v1268 = vsel %vm1252, %v1156, 0.0
  %v1269 = vsel %vm1253, %v1157, 0.0
  %v1270 = vsel %vm1254, %v1158, 0.0
  %v1271 = vsel %vm1255, %v1159, 0.0
  %v1272 = vsel %vm1256, %v1160, 0.0
  %v1273 = vsel %vm1257, %v1161, 0.0
  %v1274 = vsel %vm1258, %v1162, 0.0
  %v1275 = vsel %vm1259, %v1163, 0.0
  %v1276 = vsel %vm1260, %v1164, 0.0
  %v1277 = vsel %vm1261, %v1165, 0.0
  %v1278 = vpack.c.bf16 %v1263, %v1262
  %v1279 = vpack.c.bf16 %v1265, %v1264
  %v1280 = vpack.c.bf16 %v1267, %v1266
  %v1281 = vpack.c.bf16 %v1269, %v1268
  %v1282 = vpack.c.bf16 %v1271, %v1270
  %v1283 = vpack.c.bf16 %v1273, %v1272
  %v1284 = vpack.c.bf16 %v1275, %v1274
  %v1285 = vpack.c.bf16 %v1277, %v1276
  %v1286 = vld [vmem:[%s7] sm:$0xf]
  %v1287 = vld [vmem:[%s7 + $0x4] sm:$0xf]
  %v1288 = vld [vmem:[%s7 + $0x8] sm:$0xf]
  %v1289 = vld [vmem:[%s7 + $0xc] sm:$0xf]
  %v1290 = vld [vmem:[%s7 + $0x10] sm:$0xf]
  %v1291 = vld [vmem:[%s7 + $0x14] sm:$0xf]
  %v1292 = vld [vmem:[%s7 + $0x18] sm:$0xf]
  %v1293 = vld [vmem:[%s7 + $0x1c] sm:$0xf]
  %v1294 = vld [vmem:[%s7 + $0x20] sm:$0xf]
  %v1295 = vld [vmem:[%s7 + $0x24] sm:$0xf]
  %v1296 = vld [vmem:[%s7 + $0x28] sm:$0xf]
  %v1297 = vld [vmem:[%s7 + $0x2c] sm:$0xf]
  %v1298 = vld [vmem:[%s7 + $0x30] sm:$0xf]
  %v1299 = vld [vmem:[%s7 + $0x34] sm:$0xf]
  %v1300 = vld [vmem:[%s7 + $0x38] sm:$0xf]
  %v1301 = vld [vmem:[%s7 + $0x3c] sm:$0xf]
  %v1302 = vld [vmem:[%s8] sm:$0x1]
  %v1304 = vlaneseq
  %v1305 = vshrl.u32 %v1304, 7
  %v1306 = vsub.s32 0, %v1305
  %v1307 = vrot.slane %v1302, %v1306
  %v1325 = vunpack.c.l.b16 %v1286
  %v1326 = vunpack.c.l.b16 %v1287
  %v1327 = vunpack.c.l.b16 %v1288
  %v1328 = vunpack.c.l.b16 %v1289
  %v1329 = vunpack.c.l.b16 %v1290
  %v1330 = vunpack.c.l.b16 %v1291
  %v1331 = vunpack.c.l.b16 %v1292
  %v1332 = vunpack.c.l.b16 %v1293
  %v1333 = vunpack.c.l.b16 %v1294
  %v1334 = vunpack.c.l.b16 %v1295
  %v1335 = vunpack.c.l.b16 %v1296
  %v1336 = vunpack.c.l.b16 %v1297
  %v1337 = vunpack.c.l.b16 %v1298
  %v1338 = vunpack.c.l.b16 %v1299
  %v1339 = vunpack.c.l.b16 %v1300
  %v1340 = vunpack.c.l.b16 %v1301
  %v1341 = vpack.c.b16 %v1326, %v1325
  %v1342 = vpack.c.b16 %v1328, %v1327
  %v1343 = vpack.c.b16 %v1330, %v1329
  %v1344 = vpack.c.b16 %v1332, %v1331
  %v1345 = vpack.c.b16 %v1334, %v1333
  %v1346 = vpack.c.b16 %v1336, %v1335
  %v1347 = vpack.c.b16 %v1338, %v1337
  %v1348 = vpack.c.b16 %v1340, %v1339
  %1357 = vmatprep.subr.bf16.mxu0 0
  %1358 = vmatpush1.bf16.msra.mxu0 %v1341
  %1359 = vmatprep.subr.bf16.mxu0 0
  %1360 = vmatpush1.bf16.msra.mxu0 %v1342
  %1361 = vmatprep.subr.bf16.mxu0 0
  %1362 = vmatpush1.bf16.msra.mxu0 %v1343
  %1363 = vmatprep.subr.bf16.mxu0 0
  %1364 = vmatpush1.bf16.msra.mxu0 %v1344
  %1365 = vmatprep.subr.bf16.mxu0 0
  %1366 = vmatpush1.bf16.msra.mxu0 %v1345
  %1367 = vmatprep.subr.bf16.mxu0 0
  %1368 = vmatpush1.bf16.msra.mxu0 %v1346
  %1369 = vmatprep.subr.bf16.mxu0 0
  %1370 = vmatpush1.bf16.msra.mxu0 %v1347
  %1371 = vmatprep.subr.bf16.mxu0 0
  %1372 = vmatpush1.bf16.msra.mxu0 %v1348
  %1373 = vmatprep.subr.bf16.mxu0 0
  %1374 = vmatpush1.bf16.msra.mxu0 0
  %1375 = vmatprep.subr.bf16.mxu0 0
  %1376 = vmatpush1.bf16.msra.mxu0 0
  %1377 = vmatprep.subr.bf16.mxu0 0
  %1378 = vmatpush1.bf16.msra.mxu0 0
  %1379 = vmatprep.subr.bf16.mxu0 0
  %1380 = vmatpush1.bf16.msra.mxu0 0
  %1381 = vmatprep.subr.bf16.mxu0 0
  %1382 = vmatpush1.bf16.msra.mxu0 0
  %1383 = vmatprep.subr.bf16.mxu0 0
  %1384 = vmatpush1.bf16.msra.mxu0 0
  %1385 = vmatprep.subr.bf16.mxu0 0
  %1386 = vmatpush1.bf16.msra.mxu0 0
  %1387 = vmatprep.subr.bf16.mxu0 0
  %1388 = vmatpush1.bf16.msra.mxu0 0
  %1389 = vmatprep.mubr.bf16.mxu0 0
  %1390 = vmatmul.mubr.bf16.gmra.mrb[0].mxu0 %v1278
  %v1391 = vpop.f32.mrb[0].mxu0
  %v1392 = vadd.f32 %v1307, %v1391
  %v1393 = vpop.f32.mrb[0].mxu0
  %v1394 = vpop.f32.mrb[0].mxu0
  %v1395 = vadd.f32 %v1307, %v1394
  %v1396 = vpop.f32.mrb[0].mxu0
  %1397 = vmatprep.mubr.bf16.mxu0 0
  %1398 = vmatmul.mubr.bf16.gmra.mrb[0].mxu0 %v1279
  %v1399 = vpop.f32.mrb[0].mxu0
  %v1400 = vadd.f32 %v1307, %v1399
  %v1401 = vpop.f32.mrb[0].mxu0
  %v1402 = vpop.f32.mrb[0].mxu0
  %v1403 = vadd.f32 %v1307, %v1402
  %v1404 = vpop.f32.mrb[0].mxu0
  %1405 = vmatprep.mubr.bf16.mxu0 0
  %1406 = vmatmul.mubr.bf16.gmra.mrb[0].mxu0 %v1280
  %v1407 = vpop.f32.mrb[0].mxu0
  %v1408 = vadd.f32 %v1307, %v1407
  %v1409 = vpop.f32.mrb[0].mxu0
  %v1410 = vpop.f32.mrb[0].mxu0
  %v1411 = vadd.f32 %v1307, %v1410
  %v1412 = vpop.f32.mrb[0].mxu0
  %1413 = vmatprep.mubr.bf16.mxu0 0
  %1414 = vmatmul.mubr.bf16.gmra.mrb[0].mxu0 %v1281
  %v1415 = vpop.f32.mrb[0].mxu0
  %v1416 = vadd.f32 %v1307, %v1415
  %v1417 = vpop.f32.mrb[0].mxu0
  %v1418 = vpop.f32.mrb[0].mxu0
  %v1419 = vadd.f32 %v1307, %v1418
  %v1420 = vpop.f32.mrb[0].mxu0
  %1421 = vmatprep.mubr.bf16.mxu0 0
  %1422 = vmatmul.mubr.bf16.gmra.mrb[0].mxu0 %v1282
  %v1423 = vpop.f32.mrb[0].mxu0
  %v1424 = vadd.f32 %v1307, %v1423
  %v1425 = vpop.f32.mrb[0].mxu0
  %v1426 = vpop.f32.mrb[0].mxu0
  %v1427 = vadd.f32 %v1307, %v1426
  %v1428 = vpop.f32.mrb[0].mxu0
  %1429 = vmatprep.mubr.bf16.mxu0 0
  %1430 = vmatmul.mubr.bf16.gmra.mrb[0].mxu0 %v1283
  %v1431 = vpop.f32.mrb[0].mxu0
  %v1432 = vadd.f32 %v1307, %v1431
  %v1433 = vpop.f32.mrb[0].mxu0
  %v1434 = vpop.f32.mrb[0].mxu0
  %v1435 = vadd.f32 %v1307, %v1434
  %v1436 = vpop.f32.mrb[0].mxu0
  %1437 = vmatprep.mubr.bf16.mxu0 0
  %1438 = vmatmul.mubr.bf16.gmra.mrb[0].mxu0 %v1284
  %v1439 = vpop.f32.mrb[0].mxu0
  %v1440 = vadd.f32 %v1307, %v1439
  %v1441 = vpop.f32.mrb[0].mxu0
  %v1442 = vpop.f32.mrb[0].mxu0
  %v1443 = vadd.f32 %v1307, %v1442
  %v1444 = vpop.f32.mrb[0].mxu0
  %1445 = vmatprep.mubr.bf16.mxu0 0
  %1446 = vmatmul.mubr.bf16.gmra.mrb[0].mxu0 %v1285
  %v1447 = vpop.f32.mrb[0].mxu0
  %v1448 = vadd.f32 %v1307, %v1447
  %v1449 = vpop.f32.mrb[0].mxu0
  %v1450 = vpop.f32.mrb[0].mxu0
  %v1451 = vadd.f32 %v1307, %v1450
  %v1452 = vpop.f32.mrb[0].mxu0
  %1453 = vdwg.mxu0
  %1454 = vst [vmem:[%s9] sm:$0xff] %v1392
  %1455 = vst [vmem:[%s9 + $0x8] sm:$0xff] %v1395
  %1456 = vst [vmem:[%s9 + $0x10] sm:$0xff] %v1400
  %1457 = vst [vmem:[%s9 + $0x18] sm:$0xff] %v1403
  %1458 = vst [vmem:[%s9 + $0x20] sm:$0xff] %v1408
  %1459 = vst [vmem:[%s9 + $0x28] sm:$0xff] %v1411
  %1460 = vst [vmem:[%s9 + $0x30] sm:$0xff] %v1416
  %1461 = vst [vmem:[%s9 + $0x38] sm:$0xff] %v1419
  %1462 = vst [vmem:[%s9 + $0x40] sm:$0xff] %v1424
  %1463 = vst [vmem:[%s9 + $0x48] sm:$0xff] %v1427
  %1464 = vst [vmem:[%s9 + $0x50] sm:$0xff] %v1432
  %1465 = vst [vmem:[%s9 + $0x58] sm:$0xff] %v1435
  %1466 = vst [vmem:[%s9 + $0x60] sm:$0xff] %v1440
  %1467 = vst [vmem:[%s9 + $0x68] sm:$0xff] %v1443
  %1468 = vst [vmem:[%s9 + $0x70] sm:$0xff] %v1448
  %1469 = vst [vmem:[%s9 + $0x78] sm:$0xff] %v1451
  // Predicated region
  $region38: #{graph_sage_forward.1} parent=0 // pred_check
    _
  $region39: #{graph_sage_forward.1} parent=0 // pred_check_branch
    %1471 = sbr.rel (0) target = $region41
  $region40: #{graph_sage_forward.1} parent=0 // pred_region
    _
  $region41: #{graph_sage_forward.1} parent=0 // pred_fallthru
    _
  // Predicated region
  $region42: #{graph_sage_forward.1} parent=0 // pred_check
    _
  $region43: #{graph_sage_forward.1} parent=0 // pred_check_branch
    %1473 = sbr.rel (0) target = $region45
  $region44: #{graph_sage_forward.1} parent=0 // pred_region
    _
  $region45: #{graph_sage_forward.1} parent=0 // pred_fallthru
    _

</llo_original>
